<compile_context>
chip_gen: v7x
topology: tpu7x:2x2x1
jax: 0.10.0
libtpu: 0.0.40
codegen_flags: <defaults>
</compile_context>

<pallas_src>
import functools

import jax
import jax.numpy as jnp
from jax import lax
from jax.experimental import pallas as pl
from jax.experimental.pallas import tpu as pltpu


PATCH = 16        # ViT patch size
ROW_PAD = 16      # 16 rows = one bf16 sublane group per vreg


# ----------------------------------------------------------------------------
# small helpers
# ----------------------------------------------------------------------------

def _round_up(n, m):
    return (n + m - 1) // m * m


def _pad_rows(x, mult=ROW_PAD):
    n = x.shape[0]
    n_pad = _round_up(n, mult)
    if n_pad == n:
        return x
    return jnp.concatenate(
        [x, jnp.zeros((n_pad - n,) + x.shape[1:], x.dtype)], axis=0)


def _vmem_limit(need_bytes):
    """Scoped-VMEM request sized to need + headroom (v7x physical VMEM is 64 MiB)."""
    return int(min(need_bytes + (12 << 20), 48 << 20))


# ----------------------------------------------------------------------------
# Pallas kernels
# ----------------------------------------------------------------------------

def retrieve_argmax_kernel(img_f_ref, txt_q_ref, out_ref, bv_ref, bi_ref):
    """Streamed (image_feat @ text_queue) running max / argmax over queue tiles.

    grid = (n_splits [parallel], tiles_per_split [arbitrary]).
    Output per split: lane-dense (1, n, 128) slab, lane0 = best value, lane1 = index.
    """
    s_id = pl.program_id(0)
    qi = pl.program_id(1)
    nq = pl.num_programs(1)

    @pl.when(qi == 0)
    def _init():
        bv_ref[...] = jnp.full(bv_ref.shape, -jnp.inf, jnp.float32)
        bi_ref[...] = jnp.zeros(bi_ref.shape, jnp.float32)

    sim = jnp.dot(img_f_ref[...], txt_q_ref[...],
                  preferred_element_type=jnp.float32)                  # (n, TQ)
    tile_q = sim.shape[1]
    base = (s_id * nq + qi) * tile_q
    col = (lax.broadcasted_iota(jnp.int32, sim.shape, 1) + base).astype(jnp.float32)
    tile_max = jnp.max(sim, axis=-1, keepdims=True)
    tile_arg = jnp.min(jnp.where(sim == tile_max, col, jnp.inf),
                       axis=-1, keepdims=True)
    better = tile_max > bv_ref[...]
    bi_ref[...] = jnp.where(better, tile_arg, bi_ref[...])
    bv_ref[...] = jnp.where(better, tile_max, bv_ref[...])

    @pl.when(qi == nq - 1)
    def _finalize():
        n = bv_ref.shape[0]
        lane = lax.broadcasted_iota(jnp.int32, (n, 128), 1)
        out_ref[0] = (jnp.where(lane == 0, bv_ref[...], 0.0)
                      + jnp.where(lane == 1, bi_ref[...], 0.0))


def ita_stats_kernel(lhs_i2t_ref, lhs_t2i_ref, txt_q_ref, img_q_ref,
                     out_i2t_ref, out_t2i_ref,
                     m_i2t, d_i2t, mm_i2t, dm_i2t, nm_i2t,
                     m_t2i, d_t2i, mm_t2i, dm_t2i, nm_t2i):
    """Streamed queue part of the ITA contrastive loss (partial flash stats).

    LHS refs are stacked [online; momentum] rows, bf16, already scaled by 1/temp,
    so one matmul per direction per tile yields both s (online) and sm (momentum)
    temperature-scaled logits.  Running stats per row:
        m, d            : online logsumexp (max, sum exp)
        mm, dm, nm      : momentum softmax (max, sum p, sum p * s_online)
    Emitted per split as a lane-dense (tb, 128) slab at the last tile.
    """
    qi = pl.program_id(1)
    nq = pl.num_programs(1)
    tb = m_i2t.shape[0]

    @pl.when(qi == 0)
    def _init():
        neg_inf = jnp.full((tb, 1), -jnp.inf, jnp.float32)
        zeros = jnp.zeros((tb, 1), jnp.float32)
        m_i2t[...] = neg_inf
        mm_i2t[...] = neg_inf
        m_t2i[...] = neg_inf
        mm_t2i[...] = neg_inf
        d_i2t[...] = zeros
        dm_i2t[...] = zeros
        nm_i2t[...] = zeros
        d_t2i[...] = zeros
        dm_t2i[...] = zeros
        nm_t2i[...] = zeros

    res_i2t = jnp.dot(lhs_i2t_ref[...], txt_q_ref[...],
                      preferred_element_type=jnp.float32)              # (2tb, TQ)
    res_t2i = jnp.dot(lhs_t2i_ref[...], img_q_ref[...],
                      preferred_element_type=jnp.float32)
    s_i2t, sm_i2t = res_i2t[:tb], res_i2t[tb:]
    s_t2i, sm_t2i = res_t2i[:tb], res_t2i[tb:]

    def _update(s, sm, m, d, mm, dm, nm):
        # online logits: running logsumexp
        m_old = m[...]
        m_new = jnp.maximum(m_old, jnp.max(s, axis=-1, keepdims=True))
        d[...] = (d[...] * jnp.exp(m_old - m_new)
                  + jnp.sum(jnp.exp(s - m_new), axis=-1, keepdims=True))
        m[...] = m_new
        # momentum logits: running softmax-weighted sum of the online logits
        mm_old = mm[...]
        mm_new = jnp.maximum(mm_old, jnp.max(sm, axis=-1, keepdims=True))
        scale = jnp.exp(mm_old - mm_new)
        p = jnp.exp(sm - mm_new)
        dm[...] = dm[...] * scale + jnp.sum(p, axis=-1, keepdims=True)
        nm[...] = nm[...] * scale + jnp.sum(p * s, axis=-1, keepdims=True)
        mm[...] = mm_new

    _update(s_i2t, sm_i2t, m_i2t, d_i2t, mm_i2t, dm_i2t, nm_i2t)
    _update(s_t2i, sm_t2i, m_t2i, d_t2i, mm_t2i, dm_t2i, nm_t2i)

    @pl.when(qi == nq - 1)
    def _finalize():
        lane = lax.broadcasted_iota(jnp.int32, (tb, 128), 1)

        def slab(m, d, mm, dm, nm):
            return (jnp.where(lane == 0, m[...], 0.0)
                    + jnp.where(lane == 1, d[...], 0.0)
                    + jnp.where(lane == 2, mm[...], 0.0)
                    + jnp.where(lane == 3, dm[...], 0.0)
                    + jnp.where(lane == 4, nm[...], 0.0))

        out_i2t_ref[0] = slab(m_i2t, d_i2t, mm_i2t, dm_i2t, nm_i2t)
        out_t2i_ref[0] = slab(m_t2i, d_t2i, mm_t2i, dm_t2i, nm_t2i)


# ----------------------------------------------------------------------------
# Pallas wrappers
# ----------------------------------------------------------------------------

def pallas_retrieve_argmax(image_feat_bf, text_queue, *, n_splits, tile_q):
    """Fused (image_feat @ text_queue).argmax(-1), streamed over queue tiles."""
    n, d = image_feat_bf.shape
    q = text_queue.shape[1]
    nq_total = q // tile_q
    nq_per = nq_total // n_splits

    need = (2 * d * tile_q * 2            # queue tile, double-buffered, bf16
            + 2 * n * d * 2               # resident LHS
            + 2 * n_splits * n * 128 * 4  # output slab
            + 2 * n * 128 * 4)            # scratch (padded)
    out = pl.pallas_call(
        retrieve_argmax_kernel,
        out_shape=jax.ShapeDtypeStruct((n_splits, n, 128), jnp.float32),
        grid_spec=pltpu.PrefetchScalarGridSpec(
            num_scalar_prefetch=0,
            grid=(n_splits, nq_per),
            in_specs=[pl.BlockSpec((n, d), lambda s, qi: (0, 0)),
                      pl.BlockSpec((d, tile_q),
                                   lambda s, qi: (0, s * nq_per + qi))],
            out_specs=pl.BlockSpec((1, n, 128), lambda s, qi: (s, 0, 0)),
            scratch_shapes=[pltpu.VMEM((n, 1), jnp.float32),
                            pltpu.VMEM((n, 1), jnp.float32)]),
        compiler_params=pltpu.CompilerParams(
            dimension_semantics=("parallel", "arbitrary"),
            vmem_limit_bytes=_vmem_limit(need)),
    )(image_feat_bf, text_queue)

    vals = out[..., 0]                       # (S, n)
    idxs = out[..., 1]
    best_split = jnp.argmax(vals, axis=0)    # (n,)
    idx = jnp.take_along_axis(idxs, best_split[None, :], axis=0)[0]
    return idx.astype(jnp.int32)


def pallas_ita_queue_stats(lhs_i2t, lhs_t2i, text_queue, image_queue,
                           *, n_splits, tile_q):
    """Streamed queue partial stats for both contrastive directions."""
    two_tb, d = lhs_i2t.shape
    tb = two_tb // 2
    q = text_queue.shape[1]
    nq_total = q // tile_q
    nq_per = nq_total // n_splits

    row_spec_a = pl.BlockSpec((two_tb, d), lambda s, qi: (0, 0))
    row_spec_b = pl.BlockSpec((two_tb, d), lambda s, qi: (0, 0))
    q_spec_t = pl.BlockSpec((d, tile_q), lambda s, qi: (0, s * nq_per + qi))
    q_spec_i = pl.BlockSpec((d, tile_q), lambda s, qi: (0, s * nq_per + qi))
    out_spec = pl.BlockSpec((1, tb, 128), lambda s, qi: (s, 0, 0))
    out_shape = jax.ShapeDtypeStruct((n_splits, tb, 128), jnp.float32)

    need = (2 * 2 * d * tile_q * 2            # 2 queue tiles, double-buffered, bf16
            + 2 * 2 * two_tb * d * 2          # 2 resident LHS blocks (x2 buffers)
            + 2 * 2 * n_splits * tb * 128 * 4  # output slabs
            + 10 * max(tb, 8) * 128 * 4)      # scratch (padded to (8,128) tiles)

    return pl.pallas_call(
        ita_stats_kernel,
        out_shape=(out_shape, out_shape),
        grid_spec=pltpu.PrefetchScalarGridSpec(
            num_scalar_prefetch=0,
            grid=(n_splits, nq_per),
            in_specs=[row_spec_a, row_spec_b, q_spec_t, q_spec_i],
            out_specs=(out_spec, out_spec),
            scratch_shapes=[pltpu.VMEM((tb, 1), jnp.float32)] * 10),
        compiler_params=pltpu.CompilerParams(
            dimension_semantics=("parallel", "arbitrary"),
            vmem_limit_bytes=_vmem_limit(need)),
    )(lhs_i2t, lhs_t2i, text_queue, image_queue)


# ----------------------------------------------------------------------------
# stat combine (plain JAX, tiny arrays)
# ----------------------------------------------------------------------------

def _local_stats(s_loc, sm_loc):
    """Stats over the small local (momentum-batch) columns."""
    m = jnp.max(s_loc, axis=-1)
    d = jnp.sum(jnp.exp(s_loc - m[:, None]), axis=-1)
    mm = jnp.max(sm_loc, axis=-1)
    p = jnp.exp(sm_loc - mm[:, None])
    dm = jnp.sum(p, axis=-1)
    nm = jnp.sum(p * s_loc, axis=-1)
    return m, d, mm, dm, nm


def _combine_direction(stats_q, loc_stats, hd, alpha, bsz):
    """loss_row = lse(sim) - alpha * E_softmax(sim_m)[sim] - (1-alpha) * <hard, sim>."""
    m_l, d_l, mm_l, dm_l, nm_l = loc_stats
    m_q = stats_q[:, :bsz, 0]
    d_q = stats_q[:, :bsz, 1]
    mm_q = stats_q[:, :bsz, 2]
    dm_q = stats_q[:, :bsz, 3]
    nm_q = stats_q[:, :bsz, 4]

    m_all = jnp.concatenate([m_q, m_l[None]], axis=0)
    d_all = jnp.concatenate([d_q, d_l[None]], axis=0)
    mm_all = jnp.concatenate([mm_q, mm_l[None]], axis=0)
    dm_all = jnp.concatenate([dm_q, dm_l[None]], axis=0)
    nm_all = jnp.concatenate([nm_q, nm_l[None]], axis=0)

    m_tot = jnp.max(m_all, axis=0)
    lse = m_tot + jnp.log(jnp.sum(d_all * jnp.exp(m_all - m_tot[None]), axis=0))
    mm_tot = jnp.max(mm_all, axis=0)
    sc = jnp.exp(mm_all - mm_tot[None])
    w = jnp.sum(nm_all * sc, axis=0) / jnp.sum(dm_all * sc, axis=0)   # exact division
    return lse - alpha * w - (1.0 - alpha) * hd


# ----------------------------------------------------------------------------
# Stand-in encoders & glue (plain JAX)
# ----------------------------------------------------------------------------

def _layernorm(x, g, b, eps=1e-6):
    mu = jnp.mean(x, axis=-1, keepdims=True)
    var = jnp.mean((x - mu) ** 2, axis=-1, keepdims=True)
    return (x - mu) / jnp.sqrt(var + eps) * g + b


def proj_normalize(x, w, b):
    """F.normalize(x @ W + b, dim=-1)  (torch eps = 1e-12)."""
    y = x @ w + b
    ss = jnp.sum(y * y, axis=-1, keepdims=True)
    return y * lax.rsqrt(jnp.maximum(ss, 1e-24))


def visual_encoder(p, image):
    """Stand-in for VisionTransformer.  image: NCHW."""
    bsz, c, h, w = image.shape
    nh, nw = h // PATCH, w // PATCH
    patches = image.reshape(bsz, c, nh, PATCH, nw, PATCH)
    patches = patches.transpose(0, 2, 4, 1, 3, 5).reshape(bsz, nh * nw, c * PATCH * PATCH)
    x = patches @ p['patch_w'] + p['patch_b']
    cls = jnp.broadcast_to(p['cls'], (bsz, 1, x.shape[-1]))
    x = jnp.concatenate([cls, x], axis=1) + p['pos']
    return _layernorm(x, p['ln_g'], p['ln_b'])


def text_encoder(p, input_ids, attention_mask):
    """Stand-in for BertModel (mode='text')."""
    x = p['emb'][input_ids] + p['pos']
    x = x * attention_mask[..., None].astype(x.dtype)
    return _layernorm(x, p['ln_g'], p['ln_b'])


# ----------------------------------------------------------------------------
# ALBEF functional forward (contrast_online=True, idx=None)
# ----------------------------------------------------------------------------

def albef_forward(params, params_m, state, image, input_ids, attention_mask,
                  alpha, momentum, queue_size, n_splits, tile_q):
    bsz = image.shape[0]
    assert queue_size % bsz == 0, "queue_size must be divisible by batch size"
    assert queue_size % (n_splits * tile_q) == 0, "queue_size must tile evenly"
    assert queue_size < 2 ** 24, "float-carried argmax index requires Q < 2^24"

    # idx is None -> self.temp.clamp_(0.001, 0.5)  (written back; torch clamp_ is in-place)
    temp = jnp.clip(params['temp'], 0.001, 0.5)
    params_out = dict(params, temp=temp)
    inv_temp = 1.0 / temp

    # --- online visual branch ---------------------------------------------------
    image_embeds = visual_encoder(params['vis'], image)
    image_feat = proj_normalize(image_embeds[:, 0, :],
                                params['vision_proj_w'], params['vision_proj_b'])  # (B, E)
    img_feat_bf = _pad_rows(image_feat).astype(jnp.bfloat16)                       # (Bp, E)

    # --- online-contrast retrieval (no_grad in torch): fused matmul + argmax -----
    ret_index = pallas_retrieve_argmax(
        img_feat_bf, state['text_queue'], n_splits=n_splits, tile_q=tile_q)[:bsz]  # (B,)
    ret_text_ids = state['text_ids_queue'][:, ret_index].T                         # (B, L)
    ret_text_mask = state['text_mask_queue'][:, ret_index].T
    input_ids_cat = jnp.concatenate([input_ids, ret_text_ids], axis=0)             # (2B, L)
    attention_mask_cat = jnp.concatenate([attention_mask, ret_text_mask], axis=0)

    # --- online text branch -------------------------------------------------------
    text_embeds = text_encoder(params['txt'], input_ids_cat, attention_mask_cat)
    text_feat_full = proj_normalize(text_embeds[:, 0, :],
                                    params['text_proj_w'], params['text_proj_b'])  # (2B, E)

    # --- momentum update (EMA) ----------------------------------------------------
    online_subset = {k: params[k] for k in params_m}
    params_m = jax.tree_util.tree_map(
        lambda pm, p: pm * momentum + p * (1.0 - momentum), params_m, online_subset)

    # --- momentum branch (no_grad) -------------------------------------------------
    image_embeds_m = visual_encoder(params_m['vis'], image)
    image_feat_m = proj_normalize(image_embeds_m[:, 0, :],
                                  params_m['vision_proj_w'], params_m['vision_proj_b'])  # (B, E)
    text_embeds_m = text_encoder(params_m['txt'], input_ids_cat, attention_mask_cat)
    text_feat_m_full = proj_normalize(text_embeds_m[:, 0, :],
                                      params_m['text_proj_w'], params_m['text_proj_b'])  # (2B, E)

    # --- stacked, temperature-pre-scaled bf16 LHS for the streamed queue kernel ----
    lhs_i2t = (jnp.concatenate([_pad_rows(image_feat), _pad_rows(image_feat_m)],
                               axis=0) * inv_temp).astype(jnp.bfloat16)             # (2Bp, E)
    lhs_t2i = (jnp.concatenate([_pad_rows(text_feat_full[:bsz]),
                                _pad_rows(text_feat_m_full[:bsz])],
                               axis=0) * inv_temp).astype(jnp.bfloat16)

    st_i2t, st_t2i = pallas_ita_queue_stats(
        lhs_i2t, lhs_t2i, state['text_queue'], state['image_queue'],
        n_splits=n_splits, tile_q=tile_q)                                            # (S, Bp, 128)

    # --- local (momentum-batch) columns: tiny, handled in plain JAX ----------------
    txt_m_local = text_feat_m_full                                                   # (2B, E)
    img_m_local = image_feat_m                                                       # (B, E)
    s_loc_i2t = (image_feat @ txt_m_local.T) * inv_temp                              # (B, 2B)
    sm_loc_i2t = (image_feat_m @ txt_m_local.T) * inv_temp
    s_loc_t2i = (text_feat_full[:bsz] @ img_m_local.T) * inv_temp                    # (B, B)
    sm_loc_t2i = (text_feat_m_full[:bsz] @ img_m_local.T) * inv_temp

    ar = jnp.arange(bsz)
    hd_i2t = 0.5 * (s_loc_i2t[ar, ar] + s_loc_i2t[ar, bsz + ar])   # targets 0.5 @ (i,i),(i,B+i)
    hd_t2i = s_loc_t2i[ar, ar]                                     # targets 1.0 @ (i,i)

    li2t = _combine_direction(st_i2t, _local_stats(s_loc_i2t, sm_loc_i2t),
                              hd_i2t, alpha, bsz)
    lt2i = _combine_direction(st_t2i, _local_stats(s_loc_t2i, sm_loc_t2i),
                              hd_t2i, alpha, bsz)
    loss_ita = 0.5 * (jnp.mean(li2t) + jnp.mean(lt2i))

    # --- dequeue & enqueue (single-device all_gather == identity) -------------------
    # state is donated by the caller so these updates happen in place (no (D,Q) copies).
    ptr = state['queue_ptr']
    new_state = dict(state)
    new_state['image_queue'] = lax.dynamic_update_slice(
        state['image_queue'], image_feat_m.T.astype(jnp.bfloat16), (0, ptr))
    new_state['text_queue'] = lax.dynamic_update_slice(
        state['text_queue'], text_feat_m_full[:bsz].T.astype(jnp.bfloat16), (0, ptr))
    new_state['text_ids_queue'] = lax.dynamic_update_slice(
        state['text_ids_queue'], input_ids.T, (0, ptr))
    new_state['text_mask_queue'] = lax.dynamic_update_slice(
        state['text_mask_queue'], attention_mask.T, (0, ptr))
    new_state['queue_ptr'] = (ptr + bsz) % queue_size

    return loss_ita, params_out, params_m, new_state


# ----------------------------------------------------------------------------
# Deterministic parameter / buffer construction
# ----------------------------------------------------------------------------

def init_all(key, *, c, img, seq_len, vocab, vision_width, text_width,
             embed_dim, queue_size, temp):
    keys = jax.random.split(key, 12)
    n_patches = (img // PATCH) ** 2
    patch_dim = c * PATCH * PATCH

    vis = dict(
        patch_w=0.02 * jax.random.normal(keys[0], (patch_dim, vision_width), jnp.float32),
        patch_b=jnp.zeros((vision_width,), jnp.float32),
        cls=0.02 * jax.random.normal(keys[1], (1, 1, vision_width), jnp.float32),
        pos=0.02 * jax.random.normal(keys[2], (1, n_patches + 1, vision_width), jnp.float32),
        ln_g=jnp.ones((vision_width,), jnp.float32),
        ln_b=jnp.zeros((vision_width,), jnp.float32),
    )
    txt = dict(
        emb=0.02 * jax.random.normal(keys[3], (vocab, text_width), jnp.float32),
        pos=0.02 * jax.random.normal(keys[4], (1, seq_len, text_width), jnp.float32),
        ln_g=jnp.ones((text_width,), jnp.float32),
        ln_b=jnp.zeros((text_width,), jnp.float32),
    )
    params = dict(
        vis=vis,
        txt=txt,
        # stored transposed w.r.t. torch nn.Linear so the projection does x @ W
        vision_proj_w=0.02 * jax.random.normal(keys[5], (vision_width, embed_dim), jnp.float32),
        vision_proj_b=jnp.zeros((1, embed_dim), jnp.float32),
        text_proj_w=0.02 * jax.random.normal(keys[6], (text_width, embed_dim), jnp.float32),
        text_proj_b=jnp.zeros((1, embed_dim), jnp.float32),
        temp=jnp.asarray(temp, jnp.float32),
    )
    # copy_params(): momentum encoders start as exact copies (same buffers; NOT donated)
    params_m = {k: params[k] for k in
                ('vis', 'vision_proj_w', 'vision_proj_b', 'txt', 'text_proj_w', 'text_proj_b')}

    iq = jax.random.normal(keys[7], (embed_dim, queue_size), jnp.float32)
    tq = jax.random.normal(keys[8], (embed_dim, queue_size), jnp.float32)
    state = dict(
        # queues stored bf16: halves HBM traffic and feeds the MXU natively
        image_queue=(iq / jnp.linalg.norm(iq, axis=0, keepdims=True)).astype(jnp.bfloat16),
        text_queue=(tq / jnp.linalg.norm(tq, axis=0, keepdims=True)).astype(jnp.bfloat16),
        queue_ptr=jnp.asarray(0, jnp.int32),
        text_ids_queue=jnp.zeros((seq_len, queue_size), jnp.int32),
        text_mask_queue=jnp.zeros((seq_len, queue_size), jnp.int32),
    )
    return params, params_m, state


# ----------------------------------------------------------------------------
# Main
# ----------------------------------------------------------------------------

if __name__ == "__main__":
    B, C, IMG = 4, 3, 32
    SEQ_LEN, VOCAB = 8, 1000
    VISION_WIDTH, TEXT_WIDTH, EMBED_DIM = 64, 64, 32
    QUEUE_SIZE = 1024
    TEMP, MOMENTUM, ALPHA = 0.07, 0.995, 0.4

    # queue streaming config: 2 splits (uses both TCs on v7x), tile_q per split.
    # At real ALBEF scale (Q = 65536) use tile_q = 2048; the demo queue is tiny so
    # a 256-wide tile is used purely to exercise multi-tile streaming + the combine.
    N_SPLITS = 2
    TILE_Q = min(2048, QUEUE_SIZE // N_SPLITS)
    if QUEUE_SIZE // N_SPLITS >= 512:
        TILE_Q = min(TILE_Q, 256)   # force >1 tile per split in the toy demo

    root = jax.random.PRNGKey(0)
    k_param, k_img, k_ids = jax.random.split(root, 3)

    params, params_m, state = init_all(
        k_param, c=C, img=IMG, seq_len=SEQ_LEN, vocab=VOCAB,
        vision_width=VISION_WIDTH, text_width=TEXT_WIDTH,
        embed_dim=EMBED_DIM, queue_size=QUEUE_SIZE, temp=TEMP)

    image = jax.random.normal(k_img, (B, C, IMG, IMG), jnp.float32)     # NCHW
    input_ids = jax.random.randint(k_ids, (B, SEQ_LEN), 0, VOCAB, jnp.int32)
    attention_mask = jnp.ones((B, SEQ_LEN), jnp.int32)

    # donate ONLY state (argnum 2): the (D, Q) queues are updated in place.
    # params_m shares buffers with params at step 0, so it must NOT be donated.
    fwd = jax.jit(functools.partial(albef_forward,
                                    momentum=MOMENTUM, queue_size=QUEUE_SIZE,
                                    n_splits=N_SPLITS, tile_q=TILE_Q),
                  donate_argnums=(2,))
    loss, params, params_m, state = fwd(params, params_m, state,
                                        image, input_ids, attention_mask,
                                        jnp.asarray(ALPHA, jnp.float32))
    loss = jax.block_until_ready(loss)
    jax.block_until_ready(state['image_queue'])

    assert jnp.isfinite(loss), f"non-finite loss: {loss}"
    print("KERNEL_OK")
</pallas_src>

<mosaic_0001>
module attributes {stable_mosaic.version = 11 : i64} {
  func.func @retrieve_argmax_kernel(%arg0: i32, %arg1: i32, %arg2: memref<16x32xbf16, #tpu.memory_space<vmem>>, %arg3: memref<32x256xbf16, #tpu.memory_space<vmem>>, %arg4: memref<1x16x128xf32, #tpu.memory_space<vmem>>, %arg5: memref<16x1xf32, #tpu.memory_space<vmem>>, %arg6: memref<16x1xf32, #tpu.memory_space<vmem>>) attributes {dimension_semantics = [#tpu.dimension_semantics<parallel>, #tpu.dimension_semantics<arbitrary>], iteration_bounds = array<i64: 2, 2>, scalar_prefetch = 0 : i64, scratch_operands = 2 : i64, tpu.core_type = #tpu.core_type<tc>, window_params = [{pipeline_mode = #tpu.pipeline_mode<synchronous>, transform_indices = @transform_0, window_bounds = array<i64: 16, 32>}, {transform_indices = @transform_1, window_bounds = array<i64: 32, 256>}, {transform_indices = @transform_2, window_bounds = array<i64: 1, 16, 128>}]} {
    %c0_i32 = arith.constant 0 : i32
    %0 = arith.cmpi eq, %arg1, %c0_i32 : i32
    %1 = arith.extui %0 : i1 to i32
    %c0_i32_0 = arith.constant 0 : i32
    %2 = arith.cmpi ne, %1, %c0_i32_0 : i32
    scf.if %2 {
      %cst_18 = arith.constant 0xFF800000 : f32
      %32 = vector.broadcast %cst_18 : f32 to vector<16x1xf32>
      %c0_19 = arith.constant 0 : index
      %c0_20 = arith.constant 0 : index
      %33 = vector.load %arg5[%c0_19, %c0_20] : memref<16x1xf32, #tpu.memory_space<vmem>>, vector<16x1xf32>
      tpu.vector_store %arg5[%c0_19, %c0_20], %32 {strides = array<i32>} : memref<16x1xf32, #tpu.memory_space<vmem>>, vector<16x1xf32>,
      %cst_21 = arith.constant 0.000000e+00 : f32
      %34 = vector.broadcast %cst_21 : f32 to vector<16x1xf32>
      %c0_22 = arith.constant 0 : index
      %c0_23 = arith.constant 0 : index
      %35 = vector.load %arg6[%c0_22, %c0_23] : memref<16x1xf32, #tpu.memory_space<vmem>>, vector<16x1xf32>
      tpu.vector_store %arg6[%c0_22, %c0_23], %34 {strides = array<i32>} : memref<16x1xf32, #tpu.memory_space<vmem>>, vector<16x1xf32>,
    } else {
    }
    %c0 = arith.constant 0 : index
    %c0_1 = arith.constant 0 : index
    %3 = vector.load %arg2[%c0, %c0_1] : memref<16x32xbf16, #tpu.memory_space<vmem>>, vector<16x32xbf16>
    %c0_2 = arith.constant 0 : index
    %c0_3 = arith.constant 0 : index
    %4 = vector.load %arg3[%c0_2, %c0_3] : memref<32x256xbf16, #tpu.memory_space<vmem>>, vector<32x256xbf16>
    %cst = arith.constant dense<0.000000e+00> : vector<16x256xf32>
    %5 = tpu.matmul %3, %4, %cst {dimension_numbers = #tpu.dot_dimension_numbers<[1], [0], [0], [1], [0, 0, 1, 1], [], []>} : vector<16x32xbf16>, vector<32x256xbf16>, vector<16x256xf32> -> vector<16x256xf32>
    %c2_i32 = arith.constant 2 : i32
    %6 = arith.muli %arg0, %c2_i32 : i32
    %7 = arith.addi %6, %arg1 : i32
    %c256_i32 = arith.constant 256 : i32
    %8 = arith.muli %7, %c256_i32 : i32
    %9 = tpu.iota {dimensions = array<i32: 1>} : vector<16x256xi32>
    %10 = vector.broadcast %8 : i32 to vector<16x256xi32>
    %11 = arith.addi %9, %10 : vector<16x256xi32>
    %12 = arith.sitofp %11 : vector<16x256xi32> to vector<16x256xf32>
    %cst_4 = arith.constant dense<0xFF800000> : vector<16xf32>
    %13 = vector.multi_reduction <maximumf>, %5, %cst_4 [1] : vector<16x256xf32> to vector<16xf32>
    %14 = vector.shape_cast %13 : vector<16xf32> to vector<16x1xf32>
    %15 = vector.broadcast %14 : vector<16x1xf32> to vector<16x256xf32>
    %16 = arith.cmpf oeq, %5, %15 : vector<16x256xf32>
    %cst_5 = arith.constant 0x7F800000 : f32
    %17 = vector.broadcast %cst_5 : f32 to vector<16x256xf32>
    %18 = arith.select %16, %12, %17 : vector<16x256xi1>, vector<16x256xf32>
    %cst_6 = arith.constant dense<0x7F800000> : vector<16xf32>
    %19 = vector.multi_reduction <minimumf>, %18, %cst_6 [1] : vector<16x256xf32> to vector<16xf32>
    %20 = vector.shape_cast %19 : vector<16xf32> to vector<16x1xf32>
    %c0_7 = arith.constant 0 : index
    %c0_8 = arith.constant 0 : index
    %21 = vector.load %arg5[%c0_7, %c0_8] : memref<16x1xf32, #tpu.memory_space<vmem>>, vector<16x1xf32>
    %22 = arith.cmpf ogt, %14, %21 : vector<16x1xf32>
    %c0_9 = arith.constant 0 : index
    %c0_10 = arith.constant 0 : index
    %23 = vector.load %arg6[%c0_9, %c0_10] : memref<16x1xf32, #tpu.memory_space<vmem>>, vector<16x1xf32>
    %24 = arith.select %22, %20, %23 : vector<16x1xi1>, vector<16x1xf32>
    %c0_11 = arith.constant 0 : index
    %c0_12 = arith.constant 0 : index
    %25 = vector.load %arg6[%c0_11, %c0_12] : memref<16x1xf32, #tpu.memory_space<vmem>>, vector<16x1xf32>
    tpu.vector_store %arg6[%c0_11, %c0_12], %24 {strides = array<i32>} : memref<16x1xf32, #tpu.memory_space<vmem>>, vector<16x1xf32>,
    %c0_13 = arith.constant 0 : index
    %c0_14 = arith.constant 0 : index
    %26 = vector.load %arg5[%c0_13, %c0_14] : memref<16x1xf32, #tpu.memory_space<vmem>>, vector<16x1xf32>
    %27 = arith.select %22, %14, %26 : vector<16x1xi1>, vector<16x1xf32>
    %c0_15 = arith.constant 0 : index
    %c0_16 = arith.constant 0 : index
    %28 = vector.load %arg5[%c0_15, %c0_16] : memref<16x1xf32, #tpu.memory_space<vmem>>, vector<16x1xf32>
    tpu.vector_store %arg5[%c0_15, %c0_16], %27 {strides = array<i32>} : memref<16x1xf32, #tpu.memory_space<vmem>>, vector<16x1xf32>,
    %c1_i32 = arith.constant 1 : i32
    %29 = arith.cmpi eq, %arg1, %c1_i32 : i32
    %30 = arith.extui %29 : i1 to i32
    %c0_i32_17 = arith.constant 0 : i32
    %31 = arith.cmpi ne, %30, %c0_i32_17 : i32
    scf.if %31 {
      %32 = tpu.iota {dimensions = array<i32: 1>} : vector<16x128xi32>
      %c0_i32_18 = arith.constant 0 : i32
      %33 = vector.broadcast %c0_i32_18 : i32 to vector<16x128xi32>
      %34 = arith.cmpi eq, %32, %33 : vector<16x128xi32>
      %c0_19 = arith.constant 0 : index
      %c0_20 = arith.constant 0 : index
      %35 = vector.load %arg5[%c0_19, %c0_20] : memref<16x1xf32, #tpu.memory_space<vmem>>, vector<16x1xf32>
      %cst_21 = arith.constant 0.000000e+00 : f32
      %36 = vector.shape_cast %35 : vector<16x1xf32> to vector<16x1xf32>
      %37 = vector.broadcast %36 : vector<16x1xf32> to vector<16x128xf32>
      %38 = vector.broadcast %cst_21 : f32 to vector<16x128xf32>
      %39 = arith.select %34, %37, %38 : vector<16x128xi1>, vector<16x128xf32>
      %c1_i32_22 = arith.constant 1 : i32
      %40 = vector.broadcast %c1_i32_22 : i32 to vector<16x128xi32>
      %41 = arith.cmpi eq, %32, %40 : vector<16x128xi32>
      %c0_23 = arith.constant 0 : index
      %c0_24 = arith.constant 0 : index
      %42 = vector.load %arg6[%c0_23, %c0_24] : memref<16x1xf32, #tpu.memory_space<vmem>>, vector<16x1xf32>
      %cst_25 = arith.constant 0.000000e+00 : f32
      %43 = vector.shape_cast %42 : vector<16x1xf32> to vector<16x1xf32>
      %44 = vector.broadcast %43 : vector<16x1xf32> to vector<16x128xf32>
      %45 = vector.broadcast %cst_25 : f32 to vector<16x128xf32>
      %46 = arith.select %41, %44, %45 : vector<16x128xi1>, vector<16x128xf32>
      %47 = arith.addf %39, %46 : vector<16x128xf32>
      %c0_26 = arith.constant 0 : index
      %c0_27 = arith.constant 0 : index
      %c0_28 = arith.constant 0 : index
      %48 = vector.load %arg4[%c0_26, %c0_27, %c0_28] : memref<1x16x128xf32, #tpu.memory_space<vmem>>, vector<1x16x128xf32>
      %49 = vector.shape_cast %48 : vector<1x16x128xf32> to vector<16x128xf32>
      %50 = vector.shape_cast %47 : vector<16x128xf32> to vector<1x16x128xf32>
      tpu.vector_store %arg4[%c0_26, %c0_27, %c0_28], %50 {strides = array<i32>} : memref<1x16x128xf32, #tpu.memory_space<vmem>>, vector<1x16x128xf32>,
    } else {
    }
    return
  }
  func.func @transform_0(%arg0: i32, %arg1: i32) -> (i32, i32) {
    %c0_i32 = arith.constant 0 : i32
    %c0_i32_0 = arith.constant 0 : i32
    %c0_i32_1 = arith.constant 0 : i32
    return %c0_i32, %c0_i32_0 : i32, i32
  }
  func.func @transform_1(%arg0: i32, %arg1: i32) -> (i32, i32) {
    %c2_i32 = arith.constant 2 : i32
    %0 = arith.muli %arg0, %c2_i32 : i32
    %1 = arith.addi %0, %arg1 : i32
    %c0_i32 = arith.constant 0 : i32
    %c0_i32_0 = arith.constant 0 : i32
    return %c0_i32, %1 : i32, i32
  }
  func.func @transform_2(%arg0: i32, %arg1: i32) -> (i32, i32, i32) {
    %c0_i32 = arith.constant 0 : i32
    %c0_i32_0 = arith.constant 0 : i32
    %c0_i32_1 = arith.constant 0 : i32
    return %arg0, %c0_i32, %c0_i32_0 : i32, i32, i32
  }
}

module attributes {stable_mosaic.version = 11 : i64} {
  func.func @ita_stats_kernel(%arg0: i32, %arg1: i32, %arg2: memref<32x32xbf16, #tpu.memory_space<vmem>>, %arg3: memref<32x32xbf16, #tpu.memory_space<vmem>>, %arg4: memref<32x256xbf16, #tpu.memory_space<vmem>>, %arg5: memref<32x256xbf16, #tpu.memory_space<vmem>>, %arg6: memref<1x16x128xf32, #tpu.memory_space<vmem>>, %arg7: memref<1x16x128xf32, #tpu.memory_space<vmem>>, %arg8: memref<16x1xf32, #tpu.memory_space<vmem>>, %arg9: memref<16x1xf32, #tpu.memory_space<vmem>>, %arg10: memref<16x1xf32, #tpu.memory_space<vmem>>, %arg11: memref<16x1xf32, #tpu.memory_space<vmem>>, %arg12: memref<16x1xf32, #tpu.memory_space<vmem>>, %arg13: memref<16x1xf32, #tpu.memory_space<vmem>>, %arg14: memref<16x1xf32, #tpu.memory_space<vmem>>, %arg15: memref<16x1xf32, #tpu.memory_space<vmem>>, %arg16: memref<16x1xf32, #tpu.memory_space<vmem>>, %arg17: memref<16x1xf32, #tpu.memory_space<vmem>>) attributes {dimension_semantics = [#tpu.dimension_semantics<parallel>, #tpu.dimension_semantics<arbitrary>], iteration_bounds = array<i64: 2, 2>, scalar_prefetch = 0 : i64, scratch_operands = 10 : i64, tpu.core_type = #tpu.core_type<tc>, window_params = [{pipeline_mode = #tpu.pipeline_mode<synchronous>, transform_indices = @transform_0, window_bounds = array<i64: 32, 32>}, {pipeline_mode = #tpu.pipeline_mode<synchronous>, transform_indices = @transform_1, window_bounds = array<i64: 32, 32>}, {transform_indices = @transform_2, window_bounds = array<i64: 32, 256>}, {transform_indices = @transform_3, window_bounds = array<i64: 32, 256>}, {transform_indices = @transform_4, window_bounds = array<i64: 1, 16, 128>}, {transform_indices = @transform_5, window_bounds = array<i64: 1, 16, 128>}]} {
    %c0_i32 = arith.constant 0 : i32
    %0 = arith.cmpi eq, %arg1, %c0_i32 : i32
    %1 = arith.extui %0 : i1 to i32
    %c0_i32_0 = arith.constant 0 : i32
    %2 = arith.cmpi ne, %1, %c0_i32_0 : i32
    scf.if %2 {
      %cst_60 = arith.constant 0xFF800000 : f32
      %94 = vector.broadcast %cst_60 : f32 to vector<16x1xf32>
      %cst_61 = arith.constant 0.000000e+00 : f32
      %95 = vector.broadcast %cst_61 : f32 to vector<16x1xf32>
      %c0_62 = arith.constant 0 : index
      %c0_63 = arith.constant 0 : index
      %96 = vector.load %arg8[%c0_62, %c0_63] : memref<16x1xf32, #tpu.memory_space<vmem>>, vector<16x1xf32>
      tpu.vector_store %arg8[%c0_62, %c0_63], %94 {strides = array<i32>} : memref<16x1xf32, #tpu.memory_space<vmem>>, vector<16x1xf32>,
      %c0_64 = arith.constant 0 : index
      %c0_65 = arith.constant 0 : index
      %97 = vector.load %arg10[%c0_64, %c0_65] : memref<16x1xf32, #tpu.memory_space<vmem>>, vector<16x1xf32>
      tpu.vector_store %arg10[%c0_64, %c0_65], %94 {strides = array<i32>} : memref<16x1xf32, #tpu.memory_space<vmem>>, vector<16x1xf32>,
      %c0_66 = arith.constant 0 : index
      %c0_67 = arith.constant 0 : index
      %98 = vector.load %arg13[%c0_66, %c0_67] : memref<16x1xf32, #tpu.memory_space<vmem>>, vector<16x1xf32>
      tpu.vector_store %arg13[%c0_66, %c0_67], %94 {strides = array<i32>} : memref<16x1xf32, #tpu.memory_space<vmem>>, vector<16x1xf32>,
      %c0_68 = arith.constant 0 : index
      %c0_69 = arith.constant 0 : index
      %99 = vector.load %arg15[%c0_68, %c0_69] : memref<16x1xf32, #tpu.memory_space<vmem>>, vector<16x1xf32>
      tpu.vector_store %arg15[%c0_68, %c0_69], %94 {strides = array<i32>} : memref<16x1xf32, #tpu.memory_space<vmem>>, vector<16x1xf32>,
      %c0_70 = arith.constant 0 : index
      %c0_71 = arith.constant 0 : index
      %100 = vector.load %arg9[%c0_70, %c0_71] : memref<16x1xf32, #tpu.memory_space<vmem>>, vector<16x1xf32>
      tpu.vector_store %arg9[%c0_70, %c0_71], %95 {strides = array<i32>} : memref<16x1xf32, #tpu.memory_space<vmem>>, vector<16x1xf32>,
      %c0_72 = arith.constant 0 : index
      %c0_73 = arith.constant 0 : index
      %101 = vector.load %arg11[%c0_72, %c0_73] : memref<16x1xf32, #tpu.memory_space<vmem>>, vector<16x1xf32>
      tpu.vector_store %arg11[%c0_72, %c0_73], %95 {strides = array<i32>} : memref<16x1xf32, #tpu.memory_space<vmem>>, vector<16x1xf32>,
      %c0_74 = arith.constant 0 : index
      %c0_75 = arith.constant 0 : index
      %102 = vector.load %arg12[%c0_74, %c0_75] : memref<16x1xf32, #tpu.memory_space<vmem>>, vector<16x1xf32>
      tpu.vector_store %arg12[%c0_74, %c0_75], %95 {strides = array<i32>} : memref<16x1xf32, #tpu.memory_space<vmem>>, vector<16x1xf32>,
      %c0_76 = arith.constant 0 : index
      %c0_77 = arith.constant 0 : index
      %103 = vector.load %arg14[%c0_76, %c0_77] : memref<16x1xf32, #tpu.memory_space<vmem>>, vector<16x1xf32>
      tpu.vector_store %arg14[%c0_76, %c0_77], %95 {strides = array<i32>} : memref<16x1xf32, #tpu.memory_space<vmem>>, vector<16x1xf32>,
      %c0_78 = arith.constant 0 : index
      %c0_79 = arith.constant 0 : index
      %104 = vector.load %arg16[%c0_78, %c0_79] : memref<16x1xf32, #tpu.memory_space<vmem>>, vector<16x1xf32>
      tpu.vector_store %arg16[%c0_78, %c0_79], %95 {strides = array<i32>} : memref<16x1xf32, #tpu.memory_space<vmem>>, vector<16x1xf32>,
      %c0_80 = arith.constant 0 : index
      %c0_81 = arith.constant 0 : index
      %105 = vector.load %arg17[%c0_80, %c0_81] : memref<16x1xf32, #tpu.memory_space<vmem>>, vector<16x1xf32>
      tpu.vector_store %arg17[%c0_80, %c0_81], %95 {strides = array<i32>} : memref<16x1xf32, #tpu.memory_space<vmem>>, vector<16x1xf32>,
    } else {
    }
    %c0 = arith.constant 0 : index
    %c0_1 = arith.constant 0 : index
    %3 = vector.load %arg2[%c0, %c0_1] : memref<32x32xbf16, #tpu.memory_space<vmem>>, vector<32x32xbf16>
    %c0_2 = arith.constant 0 : index
    %c0_3 = arith.constant 0 : index
    %4 = vector.load %arg4[%c0_2, %c0_3] : memref<32x256xbf16, #tpu.memory_space<vmem>>, vector<32x256xbf16>
    %cst = arith.constant dense<0.000000e+00> : vector<32x256xf32>
    %5 = tpu.matmul %3, %4, %cst {dimension_numbers = #tpu.dot_dimension_numbers<[1], [0], [0], [1], [0, 0, 1, 1], [], []>} : vector<32x32xbf16>, vector<32x256xbf16>, vector<32x256xf32> -> vector<32x256xf32>
    %c0_4 = arith.constant 0 : index
    %c0_5 = arith.constant 0 : index
    %6 = vector.load %arg3[%c0_4, %c0_5] : memref<32x32xbf16, #tpu.memory_space<vmem>>, vector<32x32xbf16>
    %c0_6 = arith.constant 0 : index
    %c0_7 = arith.constant 0 : index
    %7 = vector.load %arg5[%c0_6, %c0_7] : memref<32x256xbf16, #tpu.memory_space<vmem>>, vector<32x256xbf16>
    %cst_8 = arith.constant dense<0.000000e+00> : vector<32x256xf32>
    %8 = tpu.matmul %6, %7, %cst_8 {dimension_numbers = #tpu.dot_dimension_numbers<[1], [0], [0], [1], [0, 0, 1, 1], [], []>} : vector<32x32xbf16>, vector<32x256xbf16>, vector<32x256xf32> -> vector<32x256xf32>
    %9 = vector.extract_strided_slice %5 {offsets = [0, 0], sizes = [16, 256], strides = [1, 1]} : vector<32x256xf32> to vector<16x256xf32>
    %10 = vector.extract_strided_slice %5 {offsets = [16, 0], sizes = [16, 256], strides = [1, 1]} : vector<32x256xf32> to vector<16x256xf32>
    %11 = vector.extract_strided_slice %8 {offsets = [0, 0], sizes = [16, 256], strides = [1, 1]} : vector<32x256xf32> to vector<16x256xf32>
    %12 = vector.extract_strided_slice %8 {offsets = [16, 0], sizes = [16, 256], strides = [1, 1]} : vector<32x256xf32> to vector<16x256xf32>
    %c0_9 = arith.constant 0 : index
    %c0_10 = arith.constant 0 : index
    %13 = vector.load %arg8[%c0_9, %c0_10] : memref<16x1xf32, #tpu.memory_space<vmem>>, vector<16x1xf32>
    %cst_11 = arith.constant dense<0xFF800000> : vector<16xf32>
    %14 = vector.multi_reduction <maximumf>, %9, %cst_11 [1] : vector<16x256xf32> to vector<16xf32>
    %15 = vector.shape_cast %14 : vector<16xf32> to vector<16x1xf32>
    %16 = arith.maximumf %13, %15 : vector<16x1xf32>
    %c0_12 = arith.constant 0 : index
    %c0_13 = arith.constant 0 : index
    %17 = vector.load %arg9[%c0_12, %c0_13] : memref<16x1xf32, #tpu.memory_space<vmem>>, vector<16x1xf32>
    %18 = arith.subf %13, %16 : vector<16x1xf32>
    %19 = math.exp %18 : vector<16x1xf32>
    %20 = arith.mulf %17, %19 : vector<16x1xf32>
    %21 = vector.broadcast %16 : vector<16x1xf32> to vector<16x256xf32>
    %22 = arith.subf %9, %21 : vector<16x256xf32>
    %23 = math.exp %22 : vector<16x256xf32>
    %cst_14 = arith.constant dense<0.000000e+00> : vector<16xf32>
    %24 = vector.multi_reduction <add>, %23, %cst_14 [1] : vector<16x256xf32> to vector<16xf32>
    %25 = vector.shape_cast %24 : vector<16xf32> to vector<16x1xf32>
    %26 = arith.addf %20, %25 : vector<16x1xf32>
    %c0_15 = arith.constant 0 : index
    %c0_16 = arith.constant 0 : index
    %27 = vector.load %arg9[%c0_15, %c0_16] : memref<16x1xf32, #tpu.memory_space<vmem>>, vector<16x1xf32>
    tpu.vector_store %arg9[%c0_15, %c0_16], %26 {strides = array<i32>} : memref<16x1xf32, #tpu.memory_space<vmem>>, vector<16x1xf32>,
    %c0_17 = arith.constant 0 : index
    %c0_18 = arith.constant 0 : index
    %28 = vector.load %arg8[%c0_17, %c0_18] : memref<16x1xf32, #tpu.memory_space<vmem>>, vector<16x1xf32>
    tpu.vector_store %arg8[%c0_17, %c0_18], %16 {strides = array<i32>} : memref<16x1xf32, #tpu.memory_space<vmem>>, vector<16x1xf32>,
    %c0_19 = arith.constant 0 : index
    %c0_20 = arith.constant 0 : index
    %29 = vector.load %arg10[%c0_19, %c0_20] : memref<16x1xf32, #tpu.memory_space<vmem>>, vector<16x1xf32>
    %cst_21 = arith.constant dense<0xFF800000> : vector<16xf32>
    %30 = vector.multi_reduction <maximumf>, %10, %cst_21 [1] : vector<16x256xf32> to vector<16xf32>
    %31 = vector.shape_cast %30 : vector<16xf32> to vector<16x1xf32>
    %32 = arith.maximumf %29, %31 : vector<16x1xf32>
    %33 = arith.subf %29, %32 : vector<16x1xf32>
    %34 = math.exp %33 : vector<16x1xf32>
    %35 = vector.broadcast %32 : vector<16x1xf32> to vector<16x256xf32>
    %36 = arith.subf %10, %35 : vector<16x256xf32>
    %37 = math.exp %36 : vector<16x256xf32>
    %c0_22 = arith.constant 0 : index
    %c0_23 = arith.constant 0 : index
    %38 = vector.load %arg11[%c0_22, %c0_23] : memref<16x1xf32, #tpu.memory_space<vmem>>, vector<16x1xf32>
    %39 = arith.mulf %38, %34 : vector<16x1xf32>
    %cst_24 = arith.constant dense<0.000000e+00> : vector<16xf32>
    %40 = vector.multi_reduction <add>, %37, %cst_24 [1] : vector<16x256xf32> to vector<16xf32>
    %41 = vector.shape_cast %40 : vector<16xf32> to vector<16x1xf32>
    %42 = arith.addf %39, %41 : vector<16x1xf32>
    %c0_25 = arith.constant 0 : index
    %c0_26 = arith.constant 0 : index
    %43 = vector.load %arg11[%c0_25, %c0_26] : memref<16x1xf32, #tpu.memory_space<vmem>>, vector<16x1xf32>
    tpu.vector_store %arg11[%c0_25, %c0_26], %42 {strides = array<i32>} : memref<16x1xf32, #tpu.memory_space<vmem>>, vector<16x1xf32>,
    %c0_27 = arith.constant 0 : index
    %c0_28 = arith.constant 0 : index
    %44 = vector.load %arg12[%c0_27, %c0_28] : memref<16x1xf32, #tpu.memory_space<vmem>>, vector<16x1xf32>
    %45 = arith.mulf %44, %34 : vector<16x1xf32>
    %46 = arith.mulf %37, %9 : vector<16x256xf32>
    %cst_29 = arith.constant dense<0.000000e+00> : vector<16xf32>
    %47 = vector.multi_reduction <add>, %46, %cst_29 [1] : vector<16x256xf32> to vector<16xf32>
    %48 = vector.shape_cast %47 : vector<16xf32> to vector<16x1xf32>
    %49 = arith.addf %45, %48 : vector<16x1xf32>
    %c0_30 = arith.constant 0 : index
    %c0_31 = arith.constant 0 : index
    %50 = vector.load %arg12[%c0_30, %c0_31] : memref<16x1xf32, #tpu.memory_space<vmem>>, vector<16x1xf32>
    tpu.vector_store %arg12[%c0_30, %c0_31], %49 {strides = array<i32>} : memref<16x1xf32, #tpu.memory_space<vmem>>, vector<16x1xf32>,
    %c0_32 = arith.constant 0 : index
    %c0_33 = arith.constant 0 : index
    %51 = vector.load %arg10[%c0_32, %c0_33] : memref<16x1xf32, #tpu.memory_space<vmem>>, vector<16x1xf32>
    tpu.vector_store %arg10[%c0_32, %c0_33], %32 {strides = array<i32>} : memref<16x1xf32, #tpu.memory_space<vmem>>, vector<16x1xf32>,
    %c0_34 = arith.constant 0 : index
    %c0_35 = arith.constant 0 : index
    %52 = vector.load %arg13[%c0_34, %c0_35] : memref<16x1xf32, #tpu.memory_space<vmem>>, vector<16x1xf32>
    %cst_36 = arith.constant dense<0xFF800000> : vector<16xf32>
    %53 = vector.multi_reduction <maximumf>, %11, %cst_36 [1] : vector<16x256xf32> to vector<16xf32>
    %54 = vector.shape_cast %53 : vector<16xf32> to vector<16x1xf32>
    %55 = arith.maximumf %52, %54 : vector<16x1xf32>
    %c0_37 = arith.constant 0 : index
    %c0_38 = arith.constant 0 : index
    %56 = vector.load %arg14[%c0_37, %c0_38] : memref<16x1xf32, #tpu.memory_space<vmem>>, vector<16x1xf32>
    %57 = arith.subf %52, %55 : vector<16x1xf32>
    %58 = math.exp %57 : vector<16x1xf32>
    %59 = arith.mulf %56, %58 : vector<16x1xf32>
    %60 = vector.broadcast %55 : vector<16x1xf32> to vector<16x256xf32>
    %61 = arith.subf %11, %60 : vector<16x256xf32>
    %62 = math.exp %61 : vector<16x256xf32>
    %cst_39 = arith.constant dense<0.000000e+00> : vector<16xf32>
    %63 = vector.multi_reduction <add>, %62, %cst_39 [1] : vector<16x256xf32> to vector<16xf32>
    %64 = vector.shape_cast %63 : vector<16xf32> to vector<16x1xf32>
    %65 = arith.addf %59, %64 : vector<16x1xf32>
    %c0_40 = arith.constant 0 : index
    %c0_41 = arith.constant 0 : index
    %66 = vector.load %arg14[%c0_40, %c0_41] : memref<16x1xf32, #tpu.memory_space<vmem>>, vector<16x1xf32>
    tpu.vector_store %arg14[%c0_40, %c0_41], %65 {strides = array<i32>} : memref<16x1xf32, #tpu.memory_space<vmem>>, vector<16x1xf32>,
    %c0_42 = arith.constant 0 : index
    %c0_43 = arith.constant 0 : index
    %67 = vector.load %arg13[%c0_42, %c0_43] : memref<16x1xf32, #tpu.memory_space<vmem>>, vector<16x1xf32>
    tpu.vector_store %arg13[%c0_42, %c0_43], %55 {strides = array<i32>} : memref<16x1xf32, #tpu.memory_space<vmem>>, vector<16x1xf32>,
    %c0_44 = arith.constant 0 : index
    %c0_45 = arith.constant 0 : index
    %68 = vector.load %arg15[%c0_44, %c0_45] : memref<16x1xf32, #tpu.memory_space<vmem>>, vector<16x1xf32>
    %cst_46 = arith.constant dense<0xFF800000> : vector<16xf32>
    %69 = vector.multi_reduction <maximumf>, %12, %cst_46 [1] : vector<16x256xf32> to vector<16xf32>
    %70 = vector.shape_cast %69 : vector<16xf32> to vector<16x1xf32>
    %71 = arith.maximumf %68, %70 : vector<16x1xf32>
    %72 = arith.subf %68, %71 : vector<16x1xf32>
    %73 = math.exp %72 : vector<16x1xf32>
    %74 = vector.broadcast %71 : vector<16x1xf32> to vector<16x256xf32>
    %75 = arith.subf %12, %74 : vector<16x256xf32>
    %76 = math.exp %75 : vector<16x256xf32>
    %c0_47 = arith.constant 0 : index
    %c0_48 = arith.constant 0 : index
    %77 = vector.load %arg16[%c0_47, %c0_48] : memref<16x1xf32, #tpu.memory_space<vmem>>, vector<16x1xf32>
    %78 = arith.mulf %77, %73 : vector<16x1xf32>
    %cst_49 = arith.constant dense<0.000000e+00> : vector<16xf32>
    %79 = vector.multi_reduction <add>, %76, %cst_49 [1] : vector<16x256xf32> to vector<16xf32>
    %80 = vector.shape_cast %79 : vector<16xf32> to vector<16x1xf32>
    %81 = arith.addf %78, %80 : vector<16x1xf32>
    %c0_50 = arith.constant 0 : index
    %c0_51 = arith.constant 0 : index
    %82 = vector.load %arg16[%c0_50, %c0_51] : memref<16x1xf32, #tpu.memory_space<vmem>>, vector<16x1xf32>
    tpu.vector_store %arg16[%c0_50, %c0_51], %81 {strides = array<i32>} : memref<16x1xf32, #tpu.memory_space<vmem>>, vector<16x1xf32>,
    %c0_52 = arith.constant 0 : index
    %c0_53 = arith.constant 0 : index
    %83 = vector.load %arg17[%c0_52, %c0_53] : memref<16x1xf32, #tpu.memory_space<vmem>>, vector<16x1xf32>
    %84 = arith.mulf %83, %73 : vector<16x1xf32>
    %85 = arith.mulf %76, %11 : vector<16x256xf32>
    %cst_54 = arith.constant dense<0.000000e+00> : vector<16xf32>
    %86 = vector.multi_reduction <add>, %85, %cst_54 [1] : vector<16x256xf32> to vector<16xf32>
    %87 = vector.shape_cast %86 : vector<16xf32> to vector<16x1xf32>
    %88 = arith.addf %84, %87 : vector<16x1xf32>
    %c0_55 = arith.constant 0 : index
    %c0_56 = arith.constant 0 : index
    %89 = vector.load %arg17[%c0_55, %c0_56] : memref<16x1xf32, #tpu.memory_space<vmem>>, vector<16x1xf32>
    tpu.vector_store %arg17[%c0_55, %c0_56], %88 {strides = array<i32>} : memref<16x1xf32, #tpu.memory_space<vmem>>, vector<16x1xf32>,
    %c0_57 = arith.constant 0 : index
    %c0_58 = arith.constant 0 : index
    %90 = vector.load %arg15[%c0_57, %c0_58] : memref<16x1xf32, #tpu.memory_space<vmem>>, vector<16x1xf32>
    tpu.vector_store %arg15[%c0_57, %c0_58], %71 {strides = array<i32>} : memref<16x1xf32, #tpu.memory_space<vmem>>, vector<16x1xf32>,
    %c1_i32 = arith.constant 1 : i32
    %91 = arith.cmpi eq, %arg1, %c1_i32 : i32
    %92 = arith.extui %91 : i1 to i32
    %c0_i32_59 = arith.constant 0 : i32
    %93 = arith.cmpi ne, %92, %c0_i32_59 : i32
    scf.if %93 {
      %94 = tpu.iota {dimensions = array<i32: 1>} : vector<16x128xi32>
      %c0_i32_60 = arith.constant 0 : i32
      %95 = vector.broadcast %c0_i32_60 : i32 to vector<16x128xi32>
      %96 = arith.cmpi eq, %94, %95 : vector<16x128xi32>
      %c0_61 = arith.constant 0 : index
      %c0_62 = arith.constant 0 : index
      %97 = vector.load %arg8[%c0_61, %c0_62] : memref<16x1xf32, #tpu.memory_space<vmem>>, vector<16x1xf32>
      %cst_63 = arith.constant 0.000000e+00 : f32
      %98 = vector.shape_cast %97 : vector<16x1xf32> to vector<16x1xf32>
      %99 = vector.broadcast %98 : vector<16x1xf32> to vector<16x128xf32>
      %100 = vector.broadcast %cst_63 : f32 to vector<16x128xf32>
      %101 = arith.select %96, %99, %100 : vector<16x128xi1>, vector<16x128xf32>
      %c1_i32_64 = arith.constant 1 : i32
      %102 = vector.broadcast %c1_i32_64 : i32 to vector<16x128xi32>
      %103 = arith.cmpi eq, %94, %102 : vector<16x128xi32>
      %c0_65 = arith.constant 0 : index
      %c0_66 = arith.constant 0 : index
      %104 = vector.load %arg9[%c0_65, %c0_66] : memref<16x1xf32, #tpu.memory_space<vmem>>, vector<16x1xf32>
      %cst_67 = arith.constant 0.000000e+00 : f32
      %105 = vector.shape_cast %104 : vector<16x1xf32> to vector<16x1xf32>
      %106 = vector.broadcast %105 : vector<16x1xf32> to vector<16x128xf32>
      %107 = vector.broadcast %cst_67 : f32 to vector<16x128xf32>
      %108 = arith.select %103, %106, %107 : vector<16x128xi1>, vector<16x128xf32>
      %109 = arith.addf %101, %108 : vector<16x128xf32>
      %c2_i32 = arith.constant 2 : i32
      %110 = vector.broadcast %c2_i32 : i32 to vector<16x128xi32>
      %111 = arith.cmpi eq, %94, %110 : vector<16x128xi32>
      %c0_68 = arith.constant 0 : index
      %c0_69 = arith.constant 0 : index
      %112 = vector.load %arg10[%c0_68, %c0_69] : memref<16x1xf32, #tpu.memory_space<vmem>>, vector<16x1xf32>
      %cst_70 = arith.constant 0.000000e+00 : f32
      %113 = vector.shape_cast %112 : vector<16x1xf32> to vector<16x1xf32>
      %114 = vector.broadcast %113 : vector<16x1xf32> to vector<16x128xf32>
      %115 = vector.broadcast %cst_70 : f32 to vector<16x128xf32>
      %116 = arith.select %111, %114, %115 : vector<16x128xi1>, vector<16x128xf32>
      %117 = arith.addf %109, %116 : vector<16x128xf32>
      %c3_i32 = arith.constant 3 : i32
      %118 = vector.broadcast %c3_i32 : i32 to vector<16x128xi32>
      %119 = arith.cmpi eq, %94, %118 : vector<16x128xi32>
      %c0_71 = arith.constant 0 : index
      %c0_72 = arith.constant 0 : index
      %120 = vector.load %arg11[%c0_71, %c0_72] : memref<16x1xf32, #tpu.memory_space<vmem>>, vector<16x1xf32>
      %cst_73 = arith.constant 0.000000e+00 : f32
      %121 = vector.shape_cast %120 : vector<16x1xf32> to vector<16x1xf32>
      %122 = vector.broadcast %121 : vector<16x1xf32> to vector<16x128xf32>
      %123 = vector.broadcast %cst_73 : f32 to vector<16x128xf32>
      %124 = arith.select %119, %122, %123 : vector<16x128xi1>, vector<16x128xf32>
      %125 = arith.addf %117, %124 : vector<16x128xf32>
      %c4_i32 = arith.constant 4 : i32
      %126 = vector.broadcast %c4_i32 : i32 to vector<16x128xi32>
      %127 = arith.cmpi eq, %94, %126 : vector<16x128xi32>
      %c0_74 = arith.constant 0 : index
      %c0_75 = arith.constant 0 : index
      %128 = vector.load %arg12[%c0_74, %c0_75] : memref<16x1xf32, #tpu.memory_space<vmem>>, vector<16x1xf32>
      %cst_76 = arith.constant 0.000000e+00 : f32
      %129 = vector.shape_cast %128 : vector<16x1xf32> to vector<16x1xf32>
      %130 = vector.broadcast %129 : vector<16x1xf32> to vector<16x128xf32>
      %131 = vector.broadcast %cst_76 : f32 to vector<16x128xf32>
      %132 = arith.select %127, %130, %131 : vector<16x128xi1>, vector<16x128xf32>
      %133 = arith.addf %125, %132 : vector<16x128xf32>
      %c0_77 = arith.constant 0 : index
      %c0_78 = arith.constant 0 : index
      %c0_79 = arith.constant 0 : index
      %134 = vector.load %arg6[%c0_77, %c0_78, %c0_79] : memref<1x16x128xf32, #tpu.memory_space<vmem>>, vector<1x16x128xf32>
      %135 = vector.shape_cast %134 : vector<1x16x128xf32> to vector<16x128xf32>
      %136 = vector.shape_cast %133 : vector<16x128xf32> to vector<1x16x128xf32>
      tpu.vector_store %arg6[%c0_77, %c0_78, %c0_79], %136 {strides = array<i32>} : memref<1x16x128xf32, #tpu.memory_space<vmem>>, vector<1x16x128xf32>,
      %c0_i32_80 = arith.constant 0 : i32
      %137 = vector.broadcast %c0_i32_80 : i32 to vector<16x128xi32>
      %138 = arith.cmpi eq, %94, %137 : vector<16x128xi32>
      %c0_81 = arith.constant 0 : index
      %c0_82 = arith.constant 0 : index
      %139 = vector.load %arg13[%c0_81, %c0_82] : memref<16x1xf32, #tpu.memory_space<vmem>>, vector<16x1xf32>
      %cst_83 = arith.constant 0.000000e+00 : f32
      %140 = vector.shape_cast %139 : vector<16x1xf32> to vector<16x1xf32>
      %141 = vector.broadcast %140 : vector<16x1xf32> to vector<16x128xf32>
      %142 = vector.broadcast %cst_83 : f32 to vector<16x128xf32>
      %143 = arith.select %138, %141, %142 : vector<16x128xi1>, vector<16x128xf32>
      %c1_i32_84 = arith.constant 1 : i32
      %144 = vector.broadcast %c1_i32_84 : i32 to vector<16x128xi32>
      %145 = arith.cmpi eq, %94, %144 : vector<16x128xi32>
      %c0_85 = arith.constant 0 : index
      %c0_86 = arith.constant 0 : index
      %146 = vector.load %arg14[%c0_85, %c0_86] : memref<16x1xf32, #tpu.memory_space<vmem>>, vector<16x1xf32>
      %cst_87 = arith.constant 0.000000e+00 : f32
      %147 = vector.shape_cast %146 : vector<16x1xf32> to vector<16x1xf32>
      %148 = vector.broadcast %147 : vector<16x1xf32> to vector<16x128xf32>
      %149 = vector.broadcast %cst_87 : f32 to vector<16x128xf32>
      %150 = arith.select %145, %148, %149 : vector<16x128xi1>, vector<16x128xf32>
      %151 = arith.addf %143, %150 : vector<16x128xf32>
      %c2_i32_88 = arith.constant 2 : i32
      %152 = vector.broadcast %c2_i32_88 : i32 to vector<16x128xi32>
      %153 = arith.cmpi eq, %94, %152 : vector<16x128xi32>
      %c0_89 = arith.constant 0 : index
      %c0_90 = arith.constant 0 : index
      %154 = vector.load %arg15[%c0_89, %c0_90] : memref<16x1xf32, #tpu.memory_space<vmem>>, vector<16x1xf32>
      %cst_91 = arith.constant 0.000000e+00 : f32
      %155 = vector.shape_cast %154 : vector<16x1xf32> to vector<16x1xf32>
      %156 = vector.broadcast %155 : vector<16x1xf32> to vector<16x128xf32>
      %157 = vector.broadcast %cst_91 : f32 to vector<16x128xf32>
      %158 = arith.select %153, %156, %157 : vector<16x128xi1>, vector<16x128xf32>
      %159 = arith.addf %151, %158 : vector<16x128xf32>
      %c3_i32_92 = arith.constant 3 : i32
      %160 = vector.broadcast %c3_i32_92 : i32 to vector<16x128xi32>
      %161 = arith.cmpi eq, %94, %160 : vector<16x128xi32>
      %c0_93 = arith.constant 0 : index
      %c0_94 = arith.constant 0 : index
      %162 = vector.load %arg16[%c0_93, %c0_94] : memref<16x1xf32, #tpu.memory_space<vmem>>, vector<16x1xf32>
      %cst_95 = arith.constant 0.000000e+00 : f32
      %163 = vector.shape_cast %162 : vector<16x1xf32> to vector<16x1xf32>
      %164 = vector.broadcast %163 : vector<16x1xf32> to vector<16x128xf32>
      %165 = vector.broadcast %cst_95 : f32 to vector<16x128xf32>
      %166 = arith.select %161, %164, %165 : vector<16x128xi1>, vector<16x128xf32>
      %167 = arith.addf %159, %166 : vector<16x128xf32>
      %c4_i32_96 = arith.constant 4 : i32
      %168 = vector.broadcast %c4_i32_96 : i32 to vector<16x128xi32>
      %169 = arith.cmpi eq, %94, %168 : vector<16x128xi32>
      %c0_97 = arith.constant 0 : index
      %c0_98 = arith.constant 0 : index
      %170 = vector.load %arg17[%c0_97, %c0_98] : memref<16x1xf32, #tpu.memory_space<vmem>>, vector<16x1xf32>
      %cst_99 = arith.constant 0.000000e+00 : f32
      %171 = vector.shape_cast %170 : vector<16x1xf32> to vector<16x1xf32>
      %172 = vector.broadcast %171 : vector<16x1xf32> to vector<16x128xf32>
      %173 = vector.broadcast %cst_99 : f32 to vector<16x128xf32>
      %174 = arith.select %169, %172, %173 : vector<16x128xi1>, vector<16x128xf32>
      %175 = arith.addf %167, %174 : vector<16x128xf32>
      %c0_100 = arith.constant 0 : index
      %c0_101 = arith.constant 0 : index
      %c0_102 = arith.constant 0 : index
      %176 = vector.load %arg7[%c0_100, %c0_101, %c0_102] : memref<1x16x128xf32, #tpu.memory_space<vmem>>, vector<1x16x128xf32>
      %177 = vector.shape_cast %176 : vector<1x16x128xf32> to vector<16x128xf32>
      %178 = vector.shape_cast %175 : vector<16x128xf32> to vector<1x16x128xf32>
      tpu.vector_store %arg7[%c0_100, %c0_101, %c0_102], %178 {strides = array<i32>} : memref<1x16x128xf32, #tpu.memory_space<vmem>>, vector<1x16x128xf32>,
    } else {
    }
    return
  }
  func.func @transform_0(%arg0: i32, %arg1: i32) -> (i32, i32) {
    %c0_i32 = arith.constant 0 : i32
    %c0_i32_0 = arith.constant 0 : i32
    %c0_i32_1 = arith.constant 0 : i32
    return %c0_i32, %c0_i32_0 : i32, i32
  }
  func.func @transform_1(%arg0: i32, %arg1: i32) -> (i32, i32) {
    %c0_i32 = arith.constant 0 : i32
    %c0_i32_0 = arith.constant 0 : i32
    %c0_i32_1 = arith.constant 0 : i32
    return %c0_i32, %c0_i32_0 : i32, i32
  }
  func.func @transform_2(%arg0: i32, %arg1: i32) -> (i32, i32) {
    %c2_i32 = arith.constant 2 : i32
    %0 = arith.muli %arg0, %c2_i32 : i32
    %1 = arith.addi %0, %arg1 : i32
    %c0_i32 = arith.constant 0 : i32
    %c0_i32_0 = arith.constant 0 : i32
    return %c0_i32, %1 : i32, i32
  }
  func.func @transform_3(%arg0: i32, %arg1: i32) -> (i32, i32) {
    %c2_i32 = arith.constant 2 : i32
    %0 = arith.muli %arg0, %c2_i32 : i32
    %1 = arith.addi %0, %arg1 : i32
    %c0_i32 = arith.constant 0 : i32
    %c0_i32_0 = arith.constant 0 : i32
    return %c0_i32, %1 : i32, i32
  }
  func.func @transform_4(%arg0: i32, %arg1: i32) -> (i32, i32, i32) {
    %c0_i32 = arith.constant 0 : i32
    %c0_i32_0 = arith.constant 0 : i32
    %c0_i32_1 = arith.constant 0 : i32
    return %arg0, %c0_i32, %c0_i32_0 : i32, i32, i32
  }
  func.func @transform_5(%arg0: i32, %arg1: i32) -> (i32, i32, i32) {
    %c0_i32 = arith.constant 0 : i32
    %c0_i32_0 = arith.constant 0 : i32
    %c0_i32_1 = arith.constant 0 : i32
    return %arg0, %c0_i32, %c0_i32_0 : i32, i32, i32
  }
}

</mosaic_0001>

<llo_original>
// kernel: albef_forward.2
$region0: #{albef_forward.2}
  #allocation0 [shape = 'u32[]', space=smem, size = 0x4, offset = 0x4, fixed_abs, tag = 'smem constant byte address 0x4 - core index']
  #allocation1 [shape = 'u32[144,128]{1,0:T(1,128)}', space=vmem, size = 0x12000, scoped, tag = 'internal scratch']
  #allocation2 [shape = 'f32[16,1]{1,0:T(8,128)}', space=vmem, size = 0x2000, scoped, tag = 'scratch operand']
  #allocation3 [shape = 'f32[16,1]{1,0:T(8,128)}', space=vmem, size = 0x2000, scoped, tag = 'scratch operand']
  %s0 = inlined_call_operand.vmem [shape: bf16[16,32], index: 0, kind: input, shape index: {}]
  %s1 = inlined_call_operand.vmem [shape: bf16[32,1024], index: 1, kind: input, shape index: {}]
  %s2 = inlined_call_operand.vmem [shape: f32[2,16,128], index: 2, kind: output, shape index: {}]
  %s3 = sld [smem:[#allocation0]]
  $region87: #{albef_forward.2} parent=0
    _
  %s5 = ssub.s32 1, %s3
  %s6 = scalar_select 0, %s5, %s3
  $region1: #{albef_forward.2} parent=0
    #allocation4 [shape = 'u8[32768]{0}', space=vmem, size = 0x8000, scoped, tag = 'input window, operand 1']
    loop: start=0, step=1, limit=6
    $region2: #{albef_forward.2} parent=1 // loop_pre_header
      _
    $region3: #{albef_forward.2} parent=1 // loop_header
      %s8 = sphi 0, %s12
      %p9 = scmp.ge.s32.totalorder %s8, 6
      %s15 = sphi 0, %s27
      %s16 = sphi 0, %s23
      %s17 = sphi 0, %s15
      %s18 = sphi 0, %s16
      %s19 = sphi 0, %s17
      %s20 = sphi 0, %s18
      %s28 = sphi 0, %s28
      %s30 = sphi 0, %s28
      %s31 = sphi 0, %s30
      %s45 = sphi 0, %s31
      %s55 = sphi 0, %s57
      %s58 = sphi 0, %s55
      %s59 = sphi 0, %s58
      %s75 = sphi 0, %s59
      %s81 = sphi 0, %s83
      %s84 = sphi 0, %s81
      %s85 = sphi 0, %s84
      %s101 = sphi 0, %s85
    $region4: #{albef_forward.2} parent=1 // loop_header_branch
      %11 = sbr.rel (%p9) target = $region8
    $region5: #{albef_forward.2} parent=1 // loop_body
      %s13 = ssub.s32 %s8, 1
      %s14 = ssub.s32 %s8, 2
      %s21 = sadd.s32 1, %s16
      %p22 = scmp.ge.s32.totalorder %s21, 2
      %s23 = scalar_select %p22, 0, %s21
      %s24 = sadd.s32 1, %s15
      %s25 = scalar_select %p22, %s24, %s15
      %p26 = scmp.ge.s32.totalorder %s25, 2
      %s27 = scalar_select %p26, 0, %s25
      %s29 = sadd.s32 %s28, 1
      %p32 = scmp.eq.s32.totalorder %s8, 3
      %p33 = scmp.ne.s32.totalorder %s28, %s30
      %p34 = scmp.eq.s32.totalorder %s8, 0
      %p35 = por %p33, %p34
      %p36 = scmp.ne.s32.totalorder %s28, %s30
      %p37 = scmp.eq.s32.totalorder %s13, 3
      %p38 = por %p36, %p37
      %p39 = scmp.ne.s32.totalorder %s30, %s31
      %p40 = scmp.eq.s32.totalorder %s13, 0
      %p41 = por %p39, %p40
      %p42 = scmp.ne.s32.totalorder %s30, %s31
      %p43 = scmp.eq.s32.totalorder %s14, 3
      %p44 = por %p42, %p43
      %p46 = scmp.ne.s32.totalorder %s31, %s45
      %p47 = scmp.eq.s32.totalorder %s14, 0
      %p48 = por %p46, %p47
      %s49 = smul.u32 %s15, 2
      %s50 = sadd.s32 %s49, %s16
      %s51 = smul.u32 %s27, 2
      %s52 = sadd.s32 %s51, %s23
      %s53 = ssub.s32 %s50, %s52
      %p54 = scmp.eq.s32.totalorder %s53, 0
      %s56 = sadd.s32 %s55, 1
      %s57 = scalar_select %p54, %s55, %s56
      %p60 = pneg %p54
      %p61 = scmp.eq.s32.totalorder %s8, 3
      %p62 = por %p60, %p61
      %p63 = scmp.ne.s32.totalorder %s55, %s58
      %p64 = scmp.eq.s32.totalorder %s8, 0
      %p65 = por %p63, %p64
      %p66 = scmp.ne.s32.totalorder %s55, %s58
      %p67 = scmp.eq.s32.totalorder %s13, 3
      %p68 = por %p66, %p67
      %p69 = scmp.ne.s32.totalorder %s58, %s59
      %p70 = scmp.eq.s32.totalorder %s13, 0
      %p71 = por %p69, %p70
      %p72 = scmp.ne.s32.totalorder %s58, %s59
      %p73 = scmp.eq.s32.totalorder %s14, 3
      %p74 = por %p72, %p73
      %p76 = scmp.ne.s32.totalorder %s59, %s75
      %p77 = scmp.eq.s32.totalorder %s14, 0
      %p78 = por %p76, %p77
      %s79 = ssub.s32 %s15, %s27
      %p80 = scmp.eq.s32.totalorder %s79, 0
      %s82 = sadd.s32 %s81, 1
      %s83 = scalar_select %p80, %s81, %s82
      %p86 = pneg %p80
      %p87 = scmp.eq.s32.totalorder %s8, 3
      %p88 = por %p86, %p87
      %p89 = scmp.ne.s32.totalorder %s81, %s84
      %p90 = scmp.eq.s32.totalorder %s8, 0
      %p91 = por %p89, %p90
      %p92 = scmp.ne.s32.totalorder %s81, %s84
      %p93 = scmp.eq.s32.totalorder %s13, 3
      %p94 = por %p92, %p93
      %p95 = scmp.ne.s32.totalorder %s84, %s85
      %p96 = scmp.eq.s32.totalorder %s13, 0
      %p97 = por %p95, %p96
      %p98 = scmp.ne.s32.totalorder %s84, %s85
      %p99 = scmp.eq.s32.totalorder %s14, 3
      %p100 = por %p98, %p99
      %p102 = scmp.ne.s32.totalorder %s85, %s101
      %p103 = scmp.eq.s32.totalorder %s14, 0
      %p104 = por %p102, %p103
      %p105 = scmp.le.s32.totalorder 1, %s8
      %p106 = scmp.lt.s32.totalorder %s8, 5
      %p107 = pnand %p105, %p106
      %p108 = pneg %p107
      // Predicated region
      $region9: #{albef_forward.2} parent=5 // pred_check
        _
      $region10: #{albef_forward.2} parent=5 // pred_check_branch
        %110 = sbr.rel (%p107) target = $region12
      $region11: #{albef_forward.2} parent=5 // pred_region
        %s111 = ssub.s32 %s8, 1
        // Predicated region
        $region13: #{albef_forward.2} parent=11 // pred_check
          %p112 = pneg %p41
        $region14: #{albef_forward.2} parent=11 // pred_check_branch
          %114 = sbr.rel (%p112) target = $region16
        $region15: #{albef_forward.2} parent=11 // pred_region
          _
        $region16: #{albef_forward.2} parent=11 // pred_fallthru
          _
      $region12: #{albef_forward.2} parent=5 // pred_fallthru
        _
      %p115 = scmp.lt.s32.totalorder %s8, 4
      // Predicated region
      $region17: #{albef_forward.2} parent=5 // pred_check
        %p116 = pneg %p115
      $region18: #{albef_forward.2} parent=5 // pred_check_branch
        %118 = sbr.rel (%p116) target = $region20
      $region19: #{albef_forward.2} parent=5 // pred_region
        // Predicated region
        $region21: #{albef_forward.2} parent=19 // pred_check
          %p119 = pneg %p65
        $region22: #{albef_forward.2} parent=19 // pred_check_branch
          %121 = sbr.rel (%p119) target = $region24
        $region23: #{albef_forward.2} parent=19 // pred_region
          %s122 = sand.u32 %s55, 1
          %s123 = sand.u32 %s55, 1
          %s124 = smul.addr %s123, 32
          %s125 = scalar_lea.vmem [#allocation4], %s124
          %s126 = smul.u32 %s15, 2
          %s127 = sadd.s32 %s126, %s16
          %s128 = smul.u32 2, %s127
          %s129 = smul.addr %s128, 4
          %s130 = scalar_lea.vmem %s1, %s129
          // Predicated region
          $region25: #{albef_forward.2} parent=23 // pred_check
            _
          $region26: #{albef_forward.2} parent=23 // pred_check_branch
            %132 = sbr.rel (0) target = $region28
          $region27: #{albef_forward.2} parent=23 // pred_region
            // Predicated region
            $region29: #{albef_forward.2} parent=27 // pred_check
              _
            $region30: #{albef_forward.2} parent=27 // pred_check_branch
              %134 = sbr.rel (0) target = $region32
            $region31: #{albef_forward.2} parent=27 // pred_region
              // Predicated region
              $region44: #{albef_forward.2} parent=31 // pred_check
                _
              $region45: #{albef_forward.2} parent=31 // pred_check_branch
                %155 = sbr.rel (0) target = $region47
              $region46: #{albef_forward.2} parent=31 // pred_region
                loop: start=0, step=1, limit=1
                $region48: #{albef_forward.2} parent=46 // loop_pre_header
                  _
                $region49: #{albef_forward.2} parent=46 // loop_header
                  %s157 = sphi 0, %s161
                  %p158 = scmp.ge.s32.totalorder %s157, 1
                  %s162 = sphi %s130, %s130
                  %s163 = sphi %s125, %s125
                $region50: #{albef_forward.2} parent=46 // loop_header_branch
                  %160 = sbr.rel (%p158) target = $region54
                $region51: #{albef_forward.2} parent=46 // loop_body
                  %v164 = vld [vmem:[%s162] sm:$0xff]
                  %165 = vst [vmem:[%s163] sm:$0xff] %v164
                  %v166 = vld [vmem:[%s162 + $0x20] sm:$0xff]
                  %167 = vst [vmem:[%s163 + $0x8] sm:$0xff] %v166
                  %v168 = vld [vmem:[%s162 + $0x40] sm:$0xff]
                  %169 = vst [vmem:[%s163 + $0x10] sm:$0xff] %v168
                  %v170 = vld [vmem:[%s162 + $0x60] sm:$0xff]
                  %171 = vst [vmem:[%s163 + $0x18] sm:$0xff] %v170
                $region52: #{albef_forward.2} parent=46 // loop_footer
                  %s161 = sadd.s32 1, %s157
                $region53: #{albef_forward.2} parent=46 // loop_footer_branch
                  %156 = sbr.rel target = $region49
                $region54: #{albef_forward.2} parent=46 // loop_exit
                  _
              $region47: #{albef_forward.2} parent=31 // pred_fallthru
                _
              // Predicated region
              $region55: #{albef_forward.2} parent=31 // pred_check
                _
              $region56: #{albef_forward.2} parent=31 // pred_check_branch
                %173 = sbr.rel target = $region58
              $region57: #{albef_forward.2} parent=31 // pred_region
                _
              $region58: #{albef_forward.2} parent=31 // pred_fallthru
                _
            $region32: #{albef_forward.2} parent=27 // pred_fallthru
              _
            // Predicated region
            $region33: #{albef_forward.2} parent=27 // pred_check
              _
            $region34: #{albef_forward.2} parent=27 // pred_check_branch
              %136 = sbr.rel target = $region36
            $region35: #{albef_forward.2} parent=27 // pred_region
              loop: start=0, step=1, limit=1
              $region37: #{albef_forward.2} parent=35 // loop_pre_header
                _
              $region38: #{albef_forward.2} parent=35 // loop_header
                %s139 = sphi 0, %s143
                %p140 = scmp.ge.s32.totalorder %s139, 1
                %s144 = sphi %s130, %s130
                %s145 = sphi %s125, %s125
              $region39: #{albef_forward.2} parent=35 // loop_header_branch
                %142 = sbr.rel (%p140) target = $region43
              $region40: #{albef_forward.2} parent=35 // loop_body
                %v146 = vld [vmem:[%s144] sm:$0xff]
                %147 = vst [vmem:[%s145] sm:$0xff] %v146
                %v148 = vld [vmem:[%s144 + $0x20] sm:$0xff]
                %149 = vst [vmem:[%s145 + $0x8] sm:$0xff] %v148
                %v150 = vld [vmem:[%s144 + $0x40] sm:$0xff]
                %151 = vst [vmem:[%s145 + $0x10] sm:$0xff] %v150
                %v152 = vld [vmem:[%s144 + $0x60] sm:$0xff]
                %153 = vst [vmem:[%s145 + $0x18] sm:$0xff] %v152
              $region41: #{albef_forward.2} parent=35 // loop_footer
                %s143 = sadd.s32 1, %s139
              $region42: #{albef_forward.2} parent=35 // loop_footer_branch
                %138 = sbr.rel target = $region38
              $region43: #{albef_forward.2} parent=35 // loop_exit
                _
            $region36: #{albef_forward.2} parent=27 // pred_fallthru
              _
          $region28: #{albef_forward.2} parent=23 // pred_fallthru
            _
          %174 = vnop
        $region24: #{albef_forward.2} parent=19 // pred_fallthru
          _
      $region20: #{albef_forward.2} parent=5 // pred_fallthru
        _
      %p175 = scmp.le.s32.totalorder 1, %s8
      %p176 = scmp.lt.s32.totalorder %s8, 5
      %p177 = pnand %p175, %p176
      %p178 = pneg %p177
      // Predicated region
      $region59: #{albef_forward.2} parent=5 // pred_check
        _
      $region60: #{albef_forward.2} parent=5 // pred_check_branch
        %180 = sbr.rel (%p177) target = $region62
      $region61: #{albef_forward.2} parent=5 // pred_region
        %s181 = ssub.s32 %s8, 1
        %s182 = sand.u32 %s58, 1
        %s183 = sand.u32 %s58, 1
        %s184 = smul.addr %s183, 32
        %s185 = scalar_lea.vmem [#allocation4], %s184
        // Predicated region
        $region63: #{albef_forward.2} parent=61 // pred_check
          %p186 = pneg %p71
        $region64: #{albef_forward.2} parent=61 // pred_check_branch
          %188 = sbr.rel (%p186) target = $region66
        $region65: #{albef_forward.2} parent=61 // pred_region
          _
        $region66: #{albef_forward.2} parent=61 // pred_fallthru
          _
        %p189 = pneg %p41
        %p190 = pneg %p38
        %s191 = sand.u32 %s58, 1
        %s192 = sand.u32 %s58, 1
        %s193 = smul.addr %s192, 32
        %s194 = scalar_lea.vmem [#allocation4], %s193
        %p195 = pneg %p71
        %p196 = pneg %p68
        %p197 = pneg %p97
        %p198 = pneg %p94
        %p199 = scmp.lt.s32.totalorder %s17, 1
        %s200 = scalar_select %p199, %s17, 1
        %s201 = smul.addr %s200, 2
        %s202 = smul.addr %s201, 8
        %s203 = scalar_lea.vmem %s2, %s202
        %s204 = smul.u32 %s17, 2
        %s205 = sadd.s32 %s204, %s18
        %s206 = smul.u32 2, %s205
        %p207 = scmp.lt.s32.totalorder %s17, 1
        %s208 = scalar_select %p207, %s17, 1
        %s209 = smul.addr %s208, 2
        %s210 = smul.addr %s209, 8
        %s211 = scalar_lea.vmem %s2, %s210
        %p213 = scmp.eq.s32.totalorder %s18, 0
        // Predicated region
        $region67: #{albef_forward.2} parent=61 // pred_check
          %p214 = pneg %p213
        $region68: #{albef_forward.2} parent=61 // pred_check_branch
          %216 = sbr.rel (%p214) target = $region70
        $region69: #{albef_forward.2} parent=61 // pred_region
          %vm217 = vcmask 7168
          %218 = vst.msk [vmem:[#allocation2] sm:$0xff] %vm217, -inf
          %219 = vst.msk [vmem:[#allocation2 + $0x8] sm:$0xff] %vm217, -inf
          %220 = vst.msk [vmem:[#allocation3] sm:$0xff] %vm217, 0.0
          %221 = vst.msk [vmem:[#allocation3 + $0x8] sm:$0xff] %vm217, 0.0
        $region70: #{albef_forward.2} parent=61 // pred_fallthru
          _
        %v222 = vld [vmem:[%s0] sm:$0xf]
        %v223 = vld [vmem:[%s0 + $0x4] sm:$0xf]
        %v224 = vld [vmem:[%s185] sm:$0xff]
        %v225 = vld [vmem:[%s185 + $0x8] sm:$0xff]
        %v226 = vld [vmem:[%s185 + $0x10] sm:$0xff]
        %v227 = vld [vmem:[%s185 + $0x18] sm:$0xff]
        %v230 = vunpack.c.l.b16 %v222
        %v231 = vunpack.c.l.b16 %v223
        %v232 = vpack.c.b16 %v231, %v230
        %v237 = vunpack.c.l.b16 %v224
        %v238 = vunpack.c.h.b16 %v224
        %v239 = vunpack.c.l.b16 %v225
        %v240 = vunpack.c.h.b16 %v225
        %v241 = vunpack.c.l.b16 %v226
        %v242 = vunpack.c.h.b16 %v226
        %v243 = vunpack.c.l.b16 %v227
        %v244 = vunpack.c.h.b16 %v227
        %v245 = vpack.c.b16 %v239, %v237
        %v246 = vpack.c.b16 %v240, %v238
        %v247 = vpack.c.b16 %v243, %v241
        %v248 = vpack.c.b16 %v244, %v242
        %vm253 = vcmask 261120
        %v255 = vsel %vm253, %v232, 0
        %257 = vmatprep.subr.bf16.mxu0 %v246
        %258 = vmatpush1.bf16.msra.mxu0 %v245
        %259 = vmatprep.subr.bf16.mxu0 %v248
        %260 = vmatpush1.bf16.msra.mxu0 %v247
        %261 = vmatprep.subr.bf16.mxu0 0
        %262 = vmatpush1.bf16.msra.mxu0 0
        %263 = vmatprep.subr.bf16.mxu0 0
        %264 = vmatpush1.bf16.msra.mxu0 0
        %265 = vmatprep.subr.bf16.mxu0 0
        %266 = vmatpush1.bf16.msra.mxu0 0
        %267 = vmatprep.subr.bf16.mxu0 0
        %268 = vmatpush1.bf16.msra.mxu0 0
        %269 = vmatprep.subr.bf16.mxu0 0
        %270 = vmatpush1.bf16.msra.mxu0 0
        %271 = vmatprep.subr.bf16.mxu0 0
        %272 = vmatpush1.bf16.msra.mxu0 0
        %273 = vmatprep.subr.bf16.mxu0 0
        %274 = vmatpush1.bf16.msra.mxu0 0
        %275 = vmatprep.subr.bf16.mxu0 0
        %276 = vmatpush1.bf16.msra.mxu0 0
        %277 = vmatprep.subr.bf16.mxu0 0
        %278 = vmatpush1.bf16.msra.mxu0 0
        %279 = vmatprep.subr.bf16.mxu0 0
        %280 = vmatpush1.bf16.msra.mxu0 0
        %281 = vmatprep.subr.bf16.mxu0 0
        %282 = vmatpush1.bf16.msra.mxu0 0
        %283 = vmatprep.subr.bf16.mxu0 0
        %284 = vmatpush1.bf16.msra.mxu0 0
        %285 = vmatprep.subr.bf16.mxu0 0
        %286 = vmatpush1.bf16.msra.mxu0 0
        %287 = vmatprep.subr.bf16.mxu0 0
        %288 = vmatpush1.bf16.msra.mxu0 0
        %289 = vmatprep.mubr.bf16.mxu0 0
        %290 = vmatmul.mubr.bf16.gmra.mrb[0].mxu0 %v255
        %v291 = vpop.f32.mrb[0].mxu0
        %v292 = vadd.f32 0.0, %v291
        %v293 = vpop.f32.mrb[0].mxu0
        %v294 = vadd.f32 0.0, %v293
        %v295 = vpop.f32.mrb[0].mxu0
        %v296 = vadd.f32 0.0, %v295
        %v297 = vpop.f32.mrb[0].mxu0
        %v298 = vadd.f32 0.0, %v297
        %299 = vdwg.mxu0
        %s300 = smul.u32 %s17, 2
        %s301 = sadd.s32 %s300, %s18
        %s302 = smul.u32 %s301, 256
        %v303 = vlaneseq
        %v304 = vand.u32 %v303, 127
        %v305 = vadd.s32 %v304, 128
        %v306 = vstv %s302
        %v307 = vadd.s32 %v304, %v306
        %v308 = vadd.s32 %v305, %v306
        %v309 = vcvt.s32.f32 %v307
        %v310 = vcvt.s32.f32 %v308
        %v311 = vmax.f32 %v292, %v294
        %312 = vmax.xlane.f32.xlu0 %v311
        %v313 = vpop.xlane.xlu0 %312
        %v314 = vmax.f32 %v296, %v298
        %315 = vmax.xlane.f32.xlu0 %v314
        %v316 = vpop.xlane.xlu0 %315
        %vm317 = vcmp.eq.f32.partialorder %v292, %v313
        %vm318 = vcmp.eq.f32.partialorder %v294, %v313
        %vm319 = vcmp.eq.f32.partialorder %v296, %v316
        %vm320 = vcmp.eq.f32.partialorder %v298, %v316
        %v321 = vsel %vm317, %v309, inf
        %v322 = vsel %vm318, %v310, inf
        %v323 = vsel %vm319, %v309, inf
        %v324 = vsel %vm320, %v310, inf
        %v325 = vmin.f32 %v321, %v322
        %326 = vmin.xlane.f32.xlu0 %v325
        %v327 = vpop.xlane.xlu0 %326
        %v328 = vmin.f32 %v323, %v324
        %329 = vmin.xlane.f32.xlu0 %v328
        %v330 = vpop.xlane.xlu0 %329
        %v331 = vld [vmem:[#allocation2] sm:$0xff]
        %v332 = vld [vmem:[#allocation2 + $0x8] sm:$0xff]
        %vm333 = vcmp.gt.f32.partialorder %v313, %v331
        %vm334 = vcmp.gt.f32.partialorder %v316, %v332
        %v335 = vld [vmem:[#allocation3] sm:$0xff]
        %v336 = vld [vmem:[#allocation3 + $0x8] sm:$0xff]
        %v337 = vsel %vm333, %v327, %v335
        %v338 = vsel %vm334, %v330, %v336
        %vm339 = vcmask 7168
        %340 = vst.msk [vmem:[#allocation3] sm:$0xff] %vm339, %v337
        %341 = vst.msk [vmem:[#allocation3 + $0x8] sm:$0xff] %vm339, %v338
        %v342 = vld [vmem:[#allocation2] sm:$0xff]
        %v343 = vld [vmem:[#allocation2 + $0x8] sm:$0xff]
        %v344 = vsel %vm333, %v313, %v342
        %v345 = vsel %vm334, %v316, %v343
        %346 = vst.msk [vmem:[#allocation2] sm:$0xff] %vm339, %v344
        %347 = vst.msk [vmem:[#allocation2 + $0x8] sm:$0xff] %vm339, %v345
        %p348 = scmp.eq.s32.totalorder %s18, 1
        // Predicated region
        $region71: #{albef_forward.2} parent=61 // pred_check
          %p349 = pneg %p348
        $region72: #{albef_forward.2} parent=61 // pred_check_branch
          %351 = sbr.rel (%p349) target = $region74
        $region73: #{albef_forward.2} parent=61 // pred_region
          %vm352 = vcmp.eq.s32.totalorder %v304, 0
          %v353 = vld [vmem:[#allocation2] sm:$0xff]
          %v354 = vld [vmem:[#allocation2 + $0x8] sm:$0xff]
          %356 = vset.pattern.permute.xlu0 0
          %357 = vperm.xlu0 %356, %v353
          %v358 = vpop.permute.xlu0 %357
          %361 = vset.pattern.permute.xlu0 0
          %362 = vperm.xlu0 %361, %v354
          %v363 = vpop.permute.xlu0 %362
          %v365 = vsel %vm352, %v358, 0.0
          %v366 = vsel %vm352, %v363, 0.0
          %vm367 = vcmp.eq.s32.totalorder %v304, 1
          %v368 = vld [vmem:[#allocation3] sm:$0xff]
          %v369 = vld [vmem:[#allocation3 + $0x8] sm:$0xff]
          %371 = vset.pattern.permute.xlu0 0
          %372 = vperm.xlu0 %371, %v368
          %v373 = vpop.permute.xlu0 %372
          %376 = vset.pattern.permute.xlu0 0
          %377 = vperm.xlu0 %376, %v369
          %v378 = vpop.permute.xlu0 %377
          %v380 = vsel %vm367, %v373, 0.0
          %v381 = vsel %vm367, %v378, 0.0
          %v382 = vadd.f32 %v365, %v380
          %v383 = vadd.f32 %v366, %v381
          %384 = vst [vmem:[%s211] sm:$0xff] %v382
          %385 = vst [vmem:[%s211 + $0x8] sm:$0xff] %v383
        $region74: #{albef_forward.2} parent=61 // pred_fallthru
          _
        %p386 = scmp.lt.s32.totalorder %s17, 1
        %s387 = scalar_select %p386, %s17, 1
        %s388 = smul.addr %s387, 2
        %s389 = smul.addr %s388, 8
        %s390 = scalar_lea.vmem %s2, %s389
        // Predicated region
        $region75: #{albef_forward.2} parent=61 // pred_check
          %p391 = pneg %p94
        $region76: #{albef_forward.2} parent=61 // pred_check_branch
          %393 = sbr.rel (%p391) target = $region78
        $region77: #{albef_forward.2} parent=61 // pred_region
          _
        $region78: #{albef_forward.2} parent=61 // pred_fallthru
          _
      $region62: #{albef_forward.2} parent=5 // pred_fallthru
        _
      %p394 = scmp.le.s32.totalorder 2, %s8
      // Predicated region
      $region79: #{albef_forward.2} parent=5 // pred_check
        %p395 = pneg %p394
      $region80: #{albef_forward.2} parent=5 // pred_check_branch
        %397 = sbr.rel (%p395) target = $region82
      $region81: #{albef_forward.2} parent=5 // pred_region
        %s398 = ssub.s32 %s8, 2
        // Predicated region
        $region83: #{albef_forward.2} parent=81 // pred_check
          %p399 = pneg %p100
        $region84: #{albef_forward.2} parent=81 // pred_check_branch
          %401 = sbr.rel (%p399) target = $region86
        $region85: #{albef_forward.2} parent=81 // pred_region
          %p402 = scmp.lt.s32.totalorder %s19, 1
          %s403 = scalar_select %p402, %s19, 1
          %s404 = smul.addr %s403, 2
          %s405 = smul.addr %s404, 8
          %s406 = scalar_lea.vmem %s2, %s405
        $region86: #{albef_forward.2} parent=81 // pred_fallthru
          _
      $region82: #{albef_forward.2} parent=5 // pred_fallthru
        _
    $region6: #{albef_forward.2} parent=1 // loop_footer
      %s12 = sadd.s32 1, %s8
    $region7: #{albef_forward.2} parent=1 // loop_footer_branch
      %7 = sbr.rel target = $region3
    $region8: #{albef_forward.2} parent=1 // loop_exit
      _

// kernel: albef_forward.3
$region0: #{albef_forward.3}
  #allocation0 [shape = 'u32[]', space=smem, size = 0x4, offset = 0x4, fixed_abs, tag = 'smem constant byte address 0x4 - core index']
  #allocation1 [shape = 'u32[144,128]{1,0:T(1,128)}', space=vmem, size = 0x12000, scoped, tag = 'internal scratch']
  #allocation2 [shape = 'f32[16,1]{1,0:T(8,128)}', space=vmem, size = 0x2000, scoped, tag = 'scratch operand']
  #allocation3 [shape = 'f32[16,1]{1,0:T(8,128)}', space=vmem, size = 0x2000, scoped, tag = 'scratch operand']
  #allocation4 [shape = 'f32[16,1]{1,0:T(8,128)}', space=vmem, size = 0x2000, scoped, tag = 'scratch operand']
  #allocation5 [shape = 'f32[16,1]{1,0:T(8,128)}', space=vmem, size = 0x2000, scoped, tag = 'scratch operand']
  #allocation6 [shape = 'f32[16,1]{1,0:T(8,128)}', space=vmem, size = 0x2000, scoped, tag = 'scratch operand']
  #allocation7 [shape = 'f32[16,1]{1,0:T(8,128)}', space=vmem, size = 0x2000, scoped, tag = 'scratch operand']
  #allocation8 [shape = 'f32[16,1]{1,0:T(8,128)}', space=vmem, size = 0x2000, scoped, tag = 'scratch operand']
  #allocation9 [shape = 'f32[16,1]{1,0:T(8,128)}', space=vmem, size = 0x2000, scoped, tag = 'scratch operand']
  #allocation10 [shape = 'f32[16,1]{1,0:T(8,128)}', space=vmem, size = 0x2000, scoped, tag = 'scratch operand']
  #allocation11 [shape = 'f32[16,1]{1,0:T(8,128)}', space=vmem, size = 0x2000, scoped, tag = 'scratch operand']
  %s0 = inlined_call_operand.vmem [shape: bf16[32,32], index: 0, kind: input, shape index: {}]
  %s1 = inlined_call_operand.vmem [shape: bf16[32,32], index: 1, kind: input, shape index: {}]
  %s2 = inlined_call_operand.vmem [shape: bf16[32,1024], index: 2, kind: input, shape index: {}]
  %s3 = inlined_call_operand.vmem [shape: bf16[32,1024], index: 3, kind: input, shape index: {}]
  %s4 = inlined_call_operand.vmem [shape: f32[2,16,128], index: 4, kind: output, shape index: {0}]
  %s5 = inlined_call_operand.vmem [shape: f32[2,16,128], index: 5, kind: output, shape index: {1}]
  %6 = xla_tuple %s4, %s5
  %s7 = sld [smem:[#allocation0]]
  $region141: #{albef_forward.3} parent=0
    _
  %s9 = ssub.s32 1, %s7
  %s10 = scalar_select 0, %s9, %s7
  $region1: #{albef_forward.3} parent=0
    #allocation12 [shape = 'u8[32768]{0}', space=vmem, size = 0x8000, scoped, tag = 'input window, operand 2']
    #allocation13 [shape = 'u8[32768]{0}', space=vmem, size = 0x8000, scoped, tag = 'input window, operand 3']
    loop: start=0, step=1, limit=6
    $region2: #{albef_forward.3} parent=1 // loop_pre_header
      _
    $region3: #{albef_forward.3} parent=1 // loop_header
      %s12 = sphi 0, %s16
      %p13 = scmp.ge.s32.totalorder %s12, 6
      %s19 = sphi 0, %s31
      %s20 = sphi 0, %s27
      %s21 = sphi 0, %s19
      %s22 = sphi 0, %s20
      %s23 = sphi 0, %s21
      %s24 = sphi 0, %s22
      %s32 = sphi 0, %s32
      %s34 = sphi 0, %s32
      %s35 = sphi 0, %s34
      %s49 = sphi 0, %s35
      %s53 = sphi 0, %s53
      %s55 = sphi 0, %s53
      %s56 = sphi 0, %s55
      %s70 = sphi 0, %s56
      %s80 = sphi 0, %s82
      %s83 = sphi 0, %s80
      %s84 = sphi 0, %s83
      %s100 = sphi 0, %s84
      %s110 = sphi 0, %s112
      %s113 = sphi 0, %s110
      %s114 = sphi 0, %s113
      %s130 = sphi 0, %s114
      %s136 = sphi 0, %s138
      %s139 = sphi 0, %s136
      %s140 = sphi 0, %s139
      %s156 = sphi 0, %s140
      %s162 = sphi 0, %s164
      %s165 = sphi 0, %s162
      %s166 = sphi 0, %s165
      %s182 = sphi 0, %s166
    $region4: #{albef_forward.3} parent=1 // loop_header_branch
      %15 = sbr.rel (%p13) target = $region8
    $region5: #{albef_forward.3} parent=1 // loop_body
      %s17 = ssub.s32 %s12, 1
      %s18 = ssub.s32 %s12, 2
      %s25 = sadd.s32 1, %s20
      %p26 = scmp.ge.s32.totalorder %s25, 2
      %s27 = scalar_select %p26, 0, %s25
      %s28 = sadd.s32 1, %s19
      %s29 = scalar_select %p26, %s28, %s19
      %p30 = scmp.ge.s32.totalorder %s29, 2
      %s31 = scalar_select %p30, 0, %s29
      %s33 = sadd.s32 %s32, 1
      %p36 = scmp.eq.s32.totalorder %s12, 3
      %p37 = scmp.ne.s32.totalorder %s32, %s34
      %p38 = scmp.eq.s32.totalorder %s12, 0
      %p39 = por %p37, %p38
      %p40 = scmp.ne.s32.totalorder %s32, %s34
      %p41 = scmp.eq.s32.totalorder %s17, 3
      %p42 = por %p40, %p41
      %p43 = scmp.ne.s32.totalorder %s34, %s35
      %p44 = scmp.eq.s32.totalorder %s17, 0
      %p45 = por %p43, %p44
      %p46 = scmp.ne.s32.totalorder %s34, %s35
      %p47 = scmp.eq.s32.totalorder %s18, 3
      %p48 = por %p46, %p47
      %p50 = scmp.ne.s32.totalorder %s35, %s49
      %p51 = scmp.eq.s32.totalorder %s18, 0
      %p52 = por %p50, %p51
      %s54 = sadd.s32 %s53, 1
      %p57 = scmp.eq.s32.totalorder %s12, 3
      %p58 = scmp.ne.s32.totalorder %s53, %s55
      %p59 = scmp.eq.s32.totalorder %s12, 0
      %p60 = por %p58, %p59
      %p61 = scmp.ne.s32.totalorder %s53, %s55
      %p62 = scmp.eq.s32.totalorder %s17, 3
      %p63 = por %p61, %p62
      %p64 = scmp.ne.s32.totalorder %s55, %s56
      %p65 = scmp.eq.s32.totalorder %s17, 0
      %p66 = por %p64, %p65
      %p67 = scmp.ne.s32.totalorder %s55, %s56
      %p68 = scmp.eq.s32.totalorder %s18, 3
      %p69 = por %p67, %p68
      %p71 = scmp.ne.s32.totalorder %s56, %s70
      %p72 = scmp.eq.s32.totalorder %s18, 0
      %p73 = por %p71, %p72
      %s74 = smul.u32 %s19, 2
      %s75 = sadd.s32 %s74, %s20
      %s76 = smul.u32 %s31, 2
      %s77 = sadd.s32 %s76, %s27
      %s78 = ssub.s32 %s75, %s77
      %p79 = scmp.eq.s32.totalorder %s78, 0
      %s81 = sadd.s32 %s80, 1
      %s82 = scalar_select %p79, %s80, %s81
      %p85 = pneg %p79
      %p86 = scmp.eq.s32.totalorder %s12, 3
      %p87 = por %p85, %p86
      %p88 = scmp.ne.s32.totalorder %s80, %s83
      %p89 = scmp.eq.s32.totalorder %s12, 0
      %p90 = por %p88, %p89
      %p91 = scmp.ne.s32.totalorder %s80, %s83
      %p92 = scmp.eq.s32.totalorder %s17, 3
      %p93 = por %p91, %p92
      %p94 = scmp.ne.s32.totalorder %s83, %s84
      %p95 = scmp.eq.s32.totalorder %s17, 0
      %p96 = por %p94, %p95
      %p97 = scmp.ne.s32.totalorder %s83, %s84
      %p98 = scmp.eq.s32.totalorder %s18, 3
      %p99 = por %p97, %p98
      %p101 = scmp.ne.s32.totalorder %s84, %s100
      %p102 = scmp.eq.s32.totalorder %s18, 0
      %p103 = por %p101, %p102
      %s104 = smul.u32 %s19, 2
      %s105 = sadd.s32 %s104, %s20
      %s106 = smul.u32 %s31, 2
      %s107 = sadd.s32 %s106, %s27
      %s108 = ssub.s32 %s105, %s107
      %p109 = scmp.eq.s32.totalorder %s108, 0
      %s111 = sadd.s32 %s110, 1
      %s112 = scalar_select %p109, %s110, %s111
      %p115 = pneg %p109
      %p116 = scmp.eq.s32.totalorder %s12, 3
      %p117 = por %p115, %p116
      %p118 = scmp.ne.s32.totalorder %s110, %s113
      %p119 = scmp.eq.s32.totalorder %s12, 0
      %p120 = por %p118, %p119
      %p121 = scmp.ne.s32.totalorder %s110, %s113
      %p122 = scmp.eq.s32.totalorder %s17, 3
      %p123 = por %p121, %p122
      %p124 = scmp.ne.s32.totalorder %s113, %s114
      %p125 = scmp.eq.s32.totalorder %s17, 0
      %p126 = por %p124, %p125
      %p127 = scmp.ne.s32.totalorder %s113, %s114
      %p128 = scmp.eq.s32.totalorder %s18, 3
      %p129 = por %p127, %p128
      %p131 = scmp.ne.s32.totalorder %s114, %s130
      %p132 = scmp.eq.s32.totalorder %s18, 0
      %p133 = por %p131, %p132
      %s134 = ssub.s32 %s19, %s31
      %p135 = scmp.eq.s32.totalorder %s134, 0
      %s137 = sadd.s32 %s136, 1
      %s138 = scalar_select %p135, %s136, %s137
      %p141 = pneg %p135
      %p142 = scmp.eq.s32.totalorder %s12, 3
      %p143 = por %p141, %p142
      %p144 = scmp.ne.s32.totalorder %s136, %s139
      %p145 = scmp.eq.s32.totalorder %s12, 0
      %p146 = por %p144, %p145
      %p147 = scmp.ne.s32.totalorder %s136, %s139
      %p148 = scmp.eq.s32.totalorder %s17, 3
      %p149 = por %p147, %p148
      %p150 = scmp.ne.s32.totalorder %s139, %s140
      %p151 = scmp.eq.s32.totalorder %s17, 0
      %p152 = por %p150, %p151
      %p153 = scmp.ne.s32.totalorder %s139, %s140
      %p154 = scmp.eq.s32.totalorder %s18, 3
      %p155 = por %p153, %p154
      %p157 = scmp.ne.s32.totalorder %s140, %s156
      %p158 = scmp.eq.s32.totalorder %s18, 0
      %p159 = por %p157, %p158
      %s160 = ssub.s32 %s19, %s31
      %p161 = scmp.eq.s32.totalorder %s160, 0
      %s163 = sadd.s32 %s162, 1
      %s164 = scalar_select %p161, %s162, %s163
      %p167 = pneg %p161
      %p168 = scmp.eq.s32.totalorder %s12, 3
      %p169 = por %p167, %p168
      %p170 = scmp.ne.s32.totalorder %s162, %s165
      %p171 = scmp.eq.s32.totalorder %s12, 0
      %p172 = por %p170, %p171
      %p173 = scmp.ne.s32.totalorder %s162, %s165
      %p174 = scmp.eq.s32.totalorder %s17, 3
      %p175 = por %p173, %p174
      %p176 = scmp.ne.s32.totalorder %s165, %s166
      %p177 = scmp.eq.s32.totalorder %s17, 0
      %p178 = por %p176, %p177
      %p179 = scmp.ne.s32.totalorder %s165, %s166
      %p180 = scmp.eq.s32.totalorder %s18, 3
      %p181 = por %p179, %p180
      %p183 = scmp.ne.s32.totalorder %s166, %s182
      %p184 = scmp.eq.s32.totalorder %s18, 0
      %p185 = por %p183, %p184
      %p186 = scmp.le.s32.totalorder 1, %s12
      %p187 = scmp.lt.s32.totalorder %s12, 5
      %p188 = pnand %p186, %p187
      %p189 = pneg %p188
      // Predicated region
      $region9: #{albef_forward.3} parent=5 // pred_check
        _
      $region10: #{albef_forward.3} parent=5 // pred_check_branch
        %191 = sbr.rel (%p188) target = $region12
      $region11: #{albef_forward.3} parent=5 // pred_region
        %s192 = ssub.s32 %s12, 1
        // Predicated region
        $region13: #{albef_forward.3} parent=11 // pred_check
          %p193 = pneg %p45
        $region14: #{albef_forward.3} parent=11 // pred_check_branch
          %195 = sbr.rel (%p193) target = $region16
        $region15: #{albef_forward.3} parent=11 // pred_region
          _
        $region16: #{albef_forward.3} parent=11 // pred_fallthru
          _
        // Predicated region
        $region17: #{albef_forward.3} parent=11 // pred_check
          %p196 = pneg %p66
        $region18: #{albef_forward.3} parent=11 // pred_check_branch
          %198 = sbr.rel (%p196) target = $region20
        $region19: #{albef_forward.3} parent=11 // pred_region
          _
        $region20: #{albef_forward.3} parent=11 // pred_fallthru
          _
      $region12: #{albef_forward.3} parent=5 // pred_fallthru
        _
      %p199 = scmp.lt.s32.totalorder %s12, 4
      // Predicated region
      $region21: #{albef_forward.3} parent=5 // pred_check
        %p200 = pneg %p199
      $region22: #{albef_forward.3} parent=5 // pred_check_branch
        %202 = sbr.rel (%p200) target = $region24
      $region23: #{albef_forward.3} parent=5 // pred_region
        // Predicated region
        $region25: #{albef_forward.3} parent=23 // pred_check
          %p203 = pneg %p90
        $region26: #{albef_forward.3} parent=23 // pred_check_branch
          %205 = sbr.rel (%p203) target = $region28
        $region27: #{albef_forward.3} parent=23 // pred_region
          %s206 = sand.u32 %s80, 1
          %s207 = sand.u32 %s80, 1
          %s208 = smul.addr %s207, 32
          %s209 = scalar_lea.vmem [#allocation12], %s208
          %s210 = smul.u32 %s19, 2
          %s211 = sadd.s32 %s210, %s20
          %s212 = smul.u32 2, %s211
          %s213 = smul.addr %s212, 4
          %s214 = scalar_lea.vmem %s2, %s213
          // Predicated region
          $region29: #{albef_forward.3} parent=27 // pred_check
            _
          $region30: #{albef_forward.3} parent=27 // pred_check_branch
            %216 = sbr.rel (0) target = $region32
          $region31: #{albef_forward.3} parent=27 // pred_region
            // Predicated region
            $region33: #{albef_forward.3} parent=31 // pred_check
              _
            $region34: #{albef_forward.3} parent=31 // pred_check_branch
              %218 = sbr.rel (0) target = $region36
            $region35: #{albef_forward.3} parent=31 // pred_region
              // Predicated region
              $region48: #{albef_forward.3} parent=35 // pred_check
                _
              $region49: #{albef_forward.3} parent=35 // pred_check_branch
                %239 = sbr.rel (0) target = $region51
              $region50: #{albef_forward.3} parent=35 // pred_region
                loop: start=0, step=1, limit=1
                $region52: #{albef_forward.3} parent=50 // loop_pre_header
                  _
                $region53: #{albef_forward.3} parent=50 // loop_header
                  %s241 = sphi 0, %s245
                  %p242 = scmp.ge.s32.totalorder %s241, 1
                  %s246 = sphi %s214, %s214
                  %s247 = sphi %s209, %s209
                $region54: #{albef_forward.3} parent=50 // loop_header_branch
                  %244 = sbr.rel (%p242) target = $region58
                $region55: #{albef_forward.3} parent=50 // loop_body
                  %v248 = vld [vmem:[%s246] sm:$0xff]
                  %249 = vst [vmem:[%s247] sm:$0xff] %v248
                  %v250 = vld [vmem:[%s246 + $0x20] sm:$0xff]
                  %251 = vst [vmem:[%s247 + $0x8] sm:$0xff] %v250
                  %v252 = vld [vmem:[%s246 + $0x40] sm:$0xff]
                  %253 = vst [vmem:[%s247 + $0x10] sm:$0xff] %v252
                  %v254 = vld [vmem:[%s246 + $0x60] sm:$0xff]
                  %255 = vst [vmem:[%s247 + $0x18] sm:$0xff] %v254
                $region56: #{albef_forward.3} parent=50 // loop_footer
                  %s245 = sadd.s32 1, %s241
                $region57: #{albef_forward.3} parent=50 // loop_footer_branch
                  %240 = sbr.rel target = $region53
                $region58: #{albef_forward.3} parent=50 // loop_exit
                  _
              $region51: #{albef_forward.3} parent=35 // pred_fallthru
                _
              // Predicated region
              $region59: #{albef_forward.3} parent=35 // pred_check
                _
              $region60: #{albef_forward.3} parent=35 // pred_check_branch
                %257 = sbr.rel target = $region62
              $region61: #{albef_forward.3} parent=35 // pred_region
                _
              $region62: #{albef_forward.3} parent=35 // pred_fallthru
                _
            $region36: #{albef_forward.3} parent=31 // pred_fallthru
              _
            // Predicated region
            $region37: #{albef_forward.3} parent=31 // pred_check
              _
            $region38: #{albef_forward.3} parent=31 // pred_check_branch
              %220 = sbr.rel target = $region40
            $region39: #{albef_forward.3} parent=31 // pred_region
              loop: start=0, step=1, limit=1
              $region41: #{albef_forward.3} parent=39 // loop_pre_header
                _
              $region42: #{albef_forward.3} parent=39 // loop_header
                %s223 = sphi 0, %s227
                %p224 = scmp.ge.s32.totalorder %s223, 1
                %s228 = sphi %s214, %s214
                %s229 = sphi %s209, %s209
              $region43: #{albef_forward.3} parent=39 // loop_header_branch
                %226 = sbr.rel (%p224) target = $region47
              $region44: #{albef_forward.3} parent=39 // loop_body
                %v230 = vld [vmem:[%s228] sm:$0xff]
                %231 = vst [vmem:[%s229] sm:$0xff] %v230
                %v232 = vld [vmem:[%s228 + $0x20] sm:$0xff]
                %233 = vst [vmem:[%s229 + $0x8] sm:$0xff] %v232
                %v234 = vld [vmem:[%s228 + $0x40] sm:$0xff]
                %235 = vst [vmem:[%s229 + $0x10] sm:$0xff] %v234
                %v236 = vld [vmem:[%s228 + $0x60] sm:$0xff]
                %237 = vst [vmem:[%s229 + $0x18] sm:$0xff] %v236
              $region45: #{albef_forward.3} parent=39 // loop_footer
                %s227 = sadd.s32 1, %s223
              $region46: #{albef_forward.3} parent=39 // loop_footer_branch
                %222 = sbr.rel target = $region42
              $region47: #{albef_forward.3} parent=39 // loop_exit
                _
            $region40: #{albef_forward.3} parent=31 // pred_fallthru
              _
          $region32: #{albef_forward.3} parent=27 // pred_fallthru
            _
          %258 = vnop
        $region28: #{albef_forward.3} parent=23 // pred_fallthru
          _
        // Predicated region
        $region63: #{albef_forward.3} parent=23 // pred_check
          %p259 = pneg %p120
        $region64: #{albef_forward.3} parent=23 // pred_check_branch
          %261 = sbr.rel (%p259) target = $region66
        $region65: #{albef_forward.3} parent=23 // pred_region
          %s262 = sand.u32 %s110, 1
          %s263 = sand.u32 %s110, 1
          %s264 = smul.addr %s263, 32
          %s265 = scalar_lea.vmem [#allocation13], %s264
          %s266 = smul.u32 %s19, 2
          %s267 = sadd.s32 %s266, %s20
          %s268 = smul.u32 2, %s267
          %s269 = smul.addr %s268, 4
          %s270 = scalar_lea.vmem %s3, %s269
          // Predicated region
          $region67: #{albef_forward.3} parent=65 // pred_check
            _
          $region68: #{albef_forward.3} parent=65 // pred_check_branch
            %272 = sbr.rel (0) target = $region70
          $region69: #{albef_forward.3} parent=65 // pred_region
            // Predicated region
            $region71: #{albef_forward.3} parent=69 // pred_check
              _
            $region72: #{albef_forward.3} parent=69 // pred_check_branch
              %274 = sbr.rel (0) target = $region74
            $region73: #{albef_forward.3} parent=69 // pred_region
              // Predicated region
              $region86: #{albef_forward.3} parent=73 // pred_check
                _
              $region87: #{albef_forward.3} parent=73 // pred_check_branch
                %295 = sbr.rel (0) target = $region89
              $region88: #{albef_forward.3} parent=73 // pred_region
                loop: start=0, step=1, limit=1
                $region90: #{albef_forward.3} parent=88 // loop_pre_header
                  _
                $region91: #{albef_forward.3} parent=88 // loop_header
                  %s297 = sphi 0, %s301
                  %p298 = scmp.ge.s32.totalorder %s297, 1
                  %s302 = sphi %s270, %s270
                  %s303 = sphi %s265, %s265
                $region92: #{albef_forward.3} parent=88 // loop_header_branch
                  %300 = sbr.rel (%p298) target = $region96
                $region93: #{albef_forward.3} parent=88 // loop_body
                  %v304 = vld [vmem:[%s302] sm:$0xff]
                  %305 = vst [vmem:[%s303] sm:$0xff] %v304
                  %v306 = vld [vmem:[%s302 + $0x20] sm:$0xff]
                  %307 = vst [vmem:[%s303 + $0x8] sm:$0xff] %v306
                  %v308 = vld [vmem:[%s302 + $0x40] sm:$0xff]
                  %309 = vst [vmem:[%s303 + $0x10] sm:$0xff] %v308
                  %v310 = vld [vmem:[%s302 + $0x60] sm:$0xff]
                  %311 = vst [vmem:[%s303 + $0x18] sm:$0xff] %v310
                $region94: #{albef_forward.3} parent=88 // loop_footer
                  %s301 = sadd.s32 1, %s297
                $region95: #{albef_forward.3} parent=88 // loop_footer_branch
                  %296 = sbr.rel target = $region91
                $region96: #{albef_forward.3} parent=88 // loop_exit
                  _
              $region89: #{albef_forward.3} parent=73 // pred_fallthru
                _
              // Predicated region
              $region97: #{albef_forward.3} parent=73 // pred_check
                _
              $region98: #{albef_forward.3} parent=73 // pred_check_branch
                %313 = sbr.rel target = $region100
              $region99: #{albef_forward.3} parent=73 // pred_region
                _
              $region100: #{albef_forward.3} parent=73 // pred_fallthru
                _
            $region74: #{albef_forward.3} parent=69 // pred_fallthru
              _
            // Predicated region
            $region75: #{albef_forward.3} parent=69 // pred_check
              _
            $region76: #{albef_forward.3} parent=69 // pred_check_branch
              %276 = sbr.rel target = $region78
            $region77: #{albef_forward.3} parent=69 // pred_region
              loop: start=0, step=1, limit=1
              $region79: #{albef_forward.3} parent=77 // loop_pre_header
                _
              $region80: #{albef_forward.3} parent=77 // loop_header
                %s279 = sphi 0, %s283
                %p280 = scmp.ge.s32.totalorder %s279, 1
                %s284 = sphi %s270, %s270
                %s285 = sphi %s265, %s265
              $region81: #{albef_forward.3} parent=77 // loop_header_branch
                %282 = sbr.rel (%p280) target = $region85
              $region82: #{albef_forward.3} parent=77 // loop_body
                %v286 = vld [vmem:[%s284] sm:$0xff]
                %287 = vst [vmem:[%s285] sm:$0xff] %v286
                %v288 = vld [vmem:[%s284 + $0x20] sm:$0xff]
                %289 = vst [vmem:[%s285 + $0x8] sm:$0xff] %v288
                %v290 = vld [vmem:[%s284 + $0x40] sm:$0xff]
                %291 = vst [vmem:[%s285 + $0x10] sm:$0xff] %v290
                %v292 = vld [vmem:[%s284 + $0x60] sm:$0xff]
                %293 = vst [vmem:[%s285 + $0x18] sm:$0xff] %v292
              $region83: #{albef_forward.3} parent=77 // loop_footer
                %s283 = sadd.s32 1, %s279
              $region84: #{albef_forward.3} parent=77 // loop_footer_branch
                %278 = sbr.rel target = $region80
              $region85: #{albef_forward.3} parent=77 // loop_exit
                _
            $region78: #{albef_forward.3} parent=69 // pred_fallthru
              _
          $region70: #{albef_forward.3} parent=65 // pred_fallthru
            _
          %314 = vnop
        $region66: #{albef_forward.3} parent=23 // pred_fallthru
          _
      $region24: #{albef_forward.3} parent=5 // pred_fallthru
        _
      %p315 = scmp.le.s32.totalorder 1, %s12
      %p316 = scmp.lt.s32.totalorder %s12, 5
      %p317 = pnand %p315, %p316
      %p318 = pneg %p317
      // Predicated region
      $region101: #{albef_forward.3} parent=5 // pred_check
        _
      $region102: #{albef_forward.3} parent=5 // pred_check_branch
        %320 = sbr.rel (%p317) target = $region104
      $region103: #{albef_forward.3} parent=5 // pred_region
        %s321 = ssub.s32 %s12, 1
        %s322 = sand.u32 %s83, 1
        %s323 = sand.u32 %s83, 1
        %s324 = smul.addr %s323, 32
        %s325 = scalar_lea.vmem [#allocation12], %s324
        // Predicated region
        $region105: #{albef_forward.3} parent=103 // pred_check
          %p326 = pneg %p96
        $region106: #{albef_forward.3} parent=103 // pred_check_branch
          %328 = sbr.rel (%p326) target = $region108
        $region107: #{albef_forward.3} parent=103 // pred_region
          _
        $region108: #{albef_forward.3} parent=103 // pred_fallthru
          _
        %s329 = sand.u32 %s113, 1
        %s330 = sand.u32 %s113, 1
        %s331 = smul.addr %s330, 32
        %s332 = scalar_lea.vmem [#allocation13], %s331
        // Predicated region
        $region109: #{albef_forward.3} parent=103 // pred_check
          %p333 = pneg %p126
        $region110: #{albef_forward.3} parent=103 // pred_check_branch
          %335 = sbr.rel (%p333) target = $region112
        $region111: #{albef_forward.3} parent=103 // pred_region
          _
        $region112: #{albef_forward.3} parent=103 // pred_fallthru
          _
        %p336 = pneg %p45
        %p337 = pneg %p42
        %p338 = pneg %p66
        %p339 = pneg %p63
        %s340 = sand.u32 %s83, 1
        %s341 = sand.u32 %s83, 1
        %s342 = smul.addr %s341, 32
        %s343 = scalar_lea.vmem [#allocation12], %s342
        %p344 = pneg %p96
        %p345 = pneg %p93
        %s346 = sand.u32 %s113, 1
        %s347 = sand.u32 %s113, 1
        %s348 = smul.addr %s347, 32
        %s349 = scalar_lea.vmem [#allocation13], %s348
        %p350 = pneg %p126
        %p351 = pneg %p123
        %p352 = pneg %p152
        %p353 = pneg %p149
        %p354 = scmp.lt.s32.totalorder %s21, 1
        %s355 = scalar_select %p354, %s21, 1
        %s356 = smul.addr %s355, 2
        %s357 = smul.addr %s356, 8
        %s358 = scalar_lea.vmem %s4, %s357
        %p359 = pneg %p178
        %p360 = pneg %p175
        %p361 = scmp.lt.s32.totalorder %s21, 1
        %s362 = scalar_select %p361, %s21, 1
        %s363 = smul.addr %s362, 2
        %s364 = smul.addr %s363, 8
        %s365 = scalar_lea.vmem %s5, %s364
        %s366 = smul.u32 %s21, 2
        %s367 = sadd.s32 %s366, %s22
        %s368 = smul.u32 2, %s367
        %s369 = smul.u32 %s21, 2
        %s370 = sadd.s32 %s369, %s22
        %s371 = smul.u32 2, %s370
        %p372 = scmp.lt.s32.totalorder %s21, 1
        %s373 = scalar_select %p372, %s21, 1
        %s374 = smul.addr %s373, 2
        %s375 = smul.addr %s374, 8
        %s376 = scalar_lea.vmem %s4, %s375
        %p377 = scmp.lt.s32.totalorder %s21, 1
        %s378 = scalar_select %p377, %s21, 1
        %s379 = smul.addr %s378, 2
        %s380 = smul.addr %s379, 8
        %s381 = scalar_lea.vmem %s5, %s380
        %p383 = scmp.eq.s32.totalorder %s22, 0
        // Predicated region
        $region113: #{albef_forward.3} parent=103 // pred_check
          %p384 = pneg %p383
        $region114: #{albef_forward.3} parent=103 // pred_check_branch
          %386 = sbr.rel (%p384) target = $region116
        $region115: #{albef_forward.3} parent=103 // pred_region
          %vm387 = vcmask 7168
          %388 = vst.msk [vmem:[#allocation2] sm:$0xff] %vm387, -inf
          %389 = vst.msk [vmem:[#allocation2 + $0x8] sm:$0xff] %vm387, -inf
          %390 = vst.msk [vmem:[#allocation4] sm:$0xff] %vm387, -inf
          %391 = vst.msk [vmem:[#allocation4 + $0x8] sm:$0xff] %vm387, -inf
          %392 = vst.msk [vmem:[#allocation7] sm:$0xff] %vm387, -inf
          %393 = vst.msk [vmem:[#allocation7 + $0x8] sm:$0xff] %vm387, -inf
          %394 = vst.msk [vmem:[#allocation9] sm:$0xff] %vm387, -inf
          %395 = vst.msk [vmem:[#allocation9 + $0x8] sm:$0xff] %vm387, -inf
          %396 = vst.msk [vmem:[#allocation3] sm:$0xff] %vm387, 0.0
          %397 = vst.msk [vmem:[#allocation3 + $0x8] sm:$0xff] %vm387, 0.0
          %398 = vst.msk [vmem:[#allocation5] sm:$0xff] %vm387, 0.0
          %399 = vst.msk [vmem:[#allocation5 + $0x8] sm:$0xff] %vm387, 0.0
          %400 = vst.msk [vmem:[#allocation6] sm:$0xff] %vm387, 0.0
          %401 = vst.msk [vmem:[#allocation6 + $0x8] sm:$0xff] %vm387, 0.0
          %402 = vst.msk [vmem:[#allocation8] sm:$0xff] %vm387, 0.0
          %403 = vst.msk [vmem:[#allocation8 + $0x8] sm:$0xff] %vm387, 0.0
          %404 = vst.msk [vmem:[#allocation10] sm:$0xff] %vm387, 0.0
          %405 = vst.msk [vmem:[#allocation10 + $0x8] sm:$0xff] %vm387, 0.0
          %406 = vst.msk [vmem:[#allocation11] sm:$0xff] %vm387, 0.0
          %407 = vst.msk [vmem:[#allocation11 + $0x8] sm:$0xff] %vm387, 0.0
        $region116: #{albef_forward.3} parent=103 // pred_fallthru
          _
        %v408 = vld [vmem:[%s0] sm:$0xf]
        %v409 = vld [vmem:[%s0 + $0x4] sm:$0xf]
        %v410 = vld [vmem:[%s0 + $0x8] sm:$0xf]
        %v411 = vld [vmem:[%s0 + $0xc] sm:$0xf]
        %v412 = vld [vmem:[%s325] sm:$0xff]
        %v413 = vld [vmem:[%s325 + $0x8] sm:$0xff]
        %v414 = vld [vmem:[%s325 + $0x10] sm:$0xff]
        %v415 = vld [vmem:[%s325 + $0x18] sm:$0xff]
        %v420 = vunpack.c.l.b16 %v408
        %v421 = vunpack.c.l.b16 %v409
        %v422 = vunpack.c.l.b16 %v410
        %v423 = vunpack.c.l.b16 %v411
        %v424 = vpack.c.b16 %v421, %v420
        %v425 = vpack.c.b16 %v423, %v422
        %v430 = vunpack.c.l.b16 %v412
        %v431 = vunpack.c.h.b16 %v412
        %v432 = vunpack.c.l.b16 %v413
        %v433 = vunpack.c.h.b16 %v413
        %v434 = vunpack.c.l.b16 %v414
        %v435 = vunpack.c.h.b16 %v414
        %v436 = vunpack.c.l.b16 %v415
        %v437 = vunpack.c.h.b16 %v415
        %v438 = vpack.c.b16 %v432, %v430
        %v439 = vpack.c.b16 %v433, %v431
        %v440 = vpack.c.b16 %v436, %v434
        %v441 = vpack.c.b16 %v437, %v435
        %vm446 = vcmask 261120
        %v448 = vsel %vm446, %v424, 0
        %v451 = vsel %vm446, %v425, 0
        %453 = vmatprep.subr.bf16.mxu0 %v439
        %454 = vmatpush1.bf16.msra.mxu0 %v438
        %455 = vmatprep.subr.bf16.mxu0 %v441
        %456 = vmatpush1.bf16.msra.mxu0 %v440
        %457 = vmatprep.subr.bf16.mxu0 0
        %458 = vmatpush1.bf16.msra.mxu0 0
        %459 = vmatprep.subr.bf16.mxu0 0
        %460 = vmatpush1.bf16.msra.mxu0 0
        %461 = vmatprep.subr.bf16.mxu0 0
        %462 = vmatpush1.bf16.msra.mxu0 0
        %463 = vmatprep.subr.bf16.mxu0 0
        %464 = vmatpush1.bf16.msra.mxu0 0
        %465 = vmatprep.subr.bf16.mxu0 0
        %466 = vmatpush1.bf16.msra.mxu0 0
        %467 = vmatprep.subr.bf16.mxu0 0
        %468 = vmatpush1.bf16.msra.mxu0 0
        %469 = vmatprep.subr.bf16.mxu0 0
        %470 = vmatpush1.bf16.msra.mxu0 0
        %471 = vmatprep.subr.bf16.mxu0 0
        %472 = vmatpush1.bf16.msra.mxu0 0
        %473 = vmatprep.subr.bf16.mxu0 0
        %474 = vmatpush1.bf16.msra.mxu0 0
        %475 = vmatprep.subr.bf16.mxu0 0
        %476 = vmatpush1.bf16.msra.mxu0 0
        %477 = vmatprep.subr.bf16.mxu0 0
        %478 = vmatpush1.bf16.msra.mxu0 0
        %479 = vmatprep.subr.bf16.mxu0 0
        %480 = vmatpush1.bf16.msra.mxu0 0
        %481 = vmatprep.subr.bf16.mxu0 0
        %482 = vmatpush1.bf16.msra.mxu0 0
        %483 = vmatprep.subr.bf16.mxu0 0
        %484 = vmatpush1.bf16.msra.mxu0 0
        %485 = vmatprep.mubr.bf16.mxu0 0
        %486 = vmatmul.mubr.bf16.gmra.mrb[0].mxu0 %v448
        %v487 = vpop.f32.mrb[0].mxu0
        %v488 = vadd.f32 0.0, %v487
        %v489 = vpop.f32.mrb[0].mxu0
        %v490 = vadd.f32 0.0, %v489
        %v491 = vpop.f32.mrb[0].mxu0
        %v492 = vadd.f32 0.0, %v491
        %v493 = vpop.f32.mrb[0].mxu0
        %v494 = vadd.f32 0.0, %v493
        %495 = vmatprep.mubr.bf16.mxu0 0
        %496 = vmatmul.mubr.bf16.gmra.mrb[0].mxu0 %v451
        %v497 = vpop.f32.mrb[0].mxu0
        %v498 = vadd.f32 0.0, %v497
        %v499 = vpop.f32.mrb[0].mxu0
        %v500 = vadd.f32 0.0, %v499
        %v501 = vpop.f32.mrb[0].mxu0
        %v502 = vadd.f32 0.0, %v501
        %v503 = vpop.f32.mrb[0].mxu0
        %v504 = vadd.f32 0.0, %v503
        %505 = vdwg.mxu0
        %v506 = vld [vmem:[%s1] sm:$0xf]
        %v507 = vld [vmem:[%s1 + $0x4] sm:$0xf]
        %v508 = vld [vmem:[%s1 + $0x8] sm:$0xf]
        %v509 = vld [vmem:[%s1 + $0xc] sm:$0xf]
        %v510 = vld [vmem:[%s332] sm:$0xff]
        %v511 = vld [vmem:[%s332 + $0x8] sm:$0xff]
        %v512 = vld [vmem:[%s332 + $0x10] sm:$0xff]
        %v513 = vld [vmem:[%s332 + $0x18] sm:$0xff]
        %v518 = vunpack.c.l.b16 %v506
        %v519 = vunpack.c.l.b16 %v507
        %v520 = vunpack.c.l.b16 %v508
        %v521 = vunpack.c.l.b16 %v509
        %v522 = vpack.c.b16 %v519, %v518
        %v523 = vpack.c.b16 %v521, %v520
        %v528 = vunpack.c.l.b16 %v510
        %v529 = vunpack.c.h.b16 %v510
        %v530 = vunpack.c.l.b16 %v511
        %v531 = vunpack.c.h.b16 %v511
        %v532 = vunpack.c.l.b16 %v512
        %v533 = vunpack.c.h.b16 %v512
        %v534 = vunpack.c.l.b16 %v513
        %v535 = vunpack.c.h.b16 %v513
        %v536 = vpack.c.b16 %v530, %v528
        %v537 = vpack.c.b16 %v531, %v529
        %v538 = vpack.c.b16 %v534, %v532
        %v539 = vpack.c.b16 %v535, %v533
        %v545 = vsel %vm446, %v522, 0
        %v548 = vsel %vm446, %v523, 0
        %550 = vmatprep.subr.bf16.mxu0 %v537
        %551 = vmatpush1.bf16.msra.mxu0 %v536
        %552 = vmatprep.subr.bf16.mxu0 %v539
        %553 = vmatpush1.bf16.msra.mxu0 %v538
        %554 = vmatprep.subr.bf16.mxu0 0
        %555 = vmatpush1.bf16.msra.mxu0 0
        %556 = vmatprep.subr.bf16.mxu0 0
        %557 = vmatpush1.bf16.msra.mxu0 0
        %558 = vmatprep.subr.bf16.mxu0 0
        %559 = vmatpush1.bf16.msra.mxu0 0
        %560 = vmatprep.subr.bf16.mxu0 0
        %561 = vmatpush1.bf16.msra.mxu0 0
        %562 = vmatprep.subr.bf16.mxu0 0
        %563 = vmatpush1.bf16.msra.mxu0 0
        %564 = vmatprep.subr.bf16.mxu0 0
        %565 = vmatpush1.bf16.msra.mxu0 0
        %566 = vmatprep.subr.bf16.mxu0 0
        %567 = vmatpush1.bf16.msra.mxu0 0
        %568 = vmatprep.subr.bf16.mxu0 0
        %569 = vmatpush1.bf16.msra.mxu0 0
        %570 = vmatprep.subr.bf16.mxu0 0
        %571 = vmatpush1.bf16.msra.mxu0 0
        %572 = vmatprep.subr.bf16.mxu0 0
        %573 = vmatpush1.bf16.msra.mxu0 0
        %574 = vmatprep.subr.bf16.mxu0 0
        %575 = vmatpush1.bf16.msra.mxu0 0
        %576 = vmatprep.subr.bf16.mxu0 0
        %577 = vmatpush1.bf16.msra.mxu0 0
        %578 = vmatprep.subr.bf16.mxu0 0
        %579 = vmatpush1.bf16.msra.mxu0 0
        %580 = vmatprep.subr.bf16.mxu0 0
        %581 = vmatpush1.bf16.msra.mxu0 0
        %582 = vmatprep.mubr.bf16.mxu0 0
        %583 = vmatmul.mubr.bf16.gmra.mrb[0].mxu0 %v545
        %v584 = vpop.f32.mrb[0].mxu0
        %v585 = vadd.f32 0.0, %v584
        %v586 = vpop.f32.mrb[0].mxu0
        %v587 = vadd.f32 0.0, %v586
        %v588 = vpop.f32.mrb[0].mxu0
        %v589 = vadd.f32 0.0, %v588
        %v590 = vpop.f32.mrb[0].mxu0
        %v591 = vadd.f32 0.0, %v590
        %592 = vmatprep.mubr.bf16.mxu0 0
        %593 = vmatmul.mubr.bf16.gmra.mrb[0].mxu0 %v548
        %v594 = vpop.f32.mrb[0].mxu0
        %v595 = vadd.f32 0.0, %v594
        %v596 = vpop.f32.mrb[0].mxu0
        %v597 = vadd.f32 0.0, %v596
        %v598 = vpop.f32.mrb[0].mxu0
        %v599 = vadd.f32 0.0, %v598
        %v600 = vpop.f32.mrb[0].mxu0
        %v601 = vadd.f32 0.0, %v600
        %602 = vdwg.mxu0
        %v603 = vld [vmem:[#allocation2] sm:$0xff]
        %v604 = vld [vmem:[#allocation2 + $0x8] sm:$0xff]
        %v605 = vmax.f32 %v488, %v490
        %606 = vmax.xlane.f32.xlu0 %v605
        %v607 = vpop.xlane.xlu0 %606
        %v608 = vmax.f32 %v492, %v494
        %609 = vmax.xlane.f32.xlu0 %v608
        %v610 = vpop.xlane.xlu0 %609
        %v611 = vmax.f32 %v603, %v607
        %v612 = vmax.f32 %v604, %v610
        %v613 = vld [vmem:[#allocation3] sm:$0xff]
        %v614 = vld [vmem:[#allocation3 + $0x8] sm:$0xff]
        %v615 = vsub.f32 %v603, %v611
        %v616 = vsub.f32 %v604, %v612
        %v617 = vmul.f32 %v615, 1.442695
        %v618 = vpow.pop %v617
        %v619 = vmul.f32 %v616, 1.442695
        %v620 = vpow.pop %v619
        %v621 = vmul.f32 %v613, %v618
        %v622 = vmul.f32 %v614, %v620
        %624 = vset.pattern.permute.xlu0 0
        %625 = vperm.xlu0 %624, %v611
        %v626 = vpop.permute.xlu0 %625
        %629 = vset.pattern.permute.xlu0 0
        %630 = vperm.xlu0 %629, %v612
        %v631 = vpop.permute.xlu0 %630
        %v633 = vsub.f32 %v488, %v626
        %v634 = vsub.f32 %v490, %v626
        %v635 = vsub.f32 %v492, %v631
        %v636 = vsub.f32 %v494, %v631
        %v637 = vmul.f32 %v633, 1.442695
        %v638 = vpow.pop %v637
        %v639 = vmul.f32 %v634, 1.442695
        %v640 = vpow.pop %v639
        %v641 = vmul.f32 %v635, 1.442695
        %v642 = vpow.pop %v641
        %v643 = vmul.f32 %v636, 1.442695
        %v644 = vpow.pop %v643
        %v645 = vadd.f32 %v638, %v640
        %646 = vadd.xlane.f32.xlu0 %v645
        %v647 = vpop.xlane.xlu0 %646
        %v648 = vadd.f32 %v642, %v644
        %649 = vadd.xlane.f32.xlu0 %v648
        %v650 = vpop.xlane.xlu0 %649
        %v651 = vadd.f32 %v621, %v647
        %v652 = vadd.f32 %v622, %v650
        %vm653 = vcmask 7168
        %654 = vst.msk [vmem:[#allocation3] sm:$0xff] %vm653, %v651
        %655 = vst.msk [vmem:[#allocation3 + $0x8] sm:$0xff] %vm653, %v652
        %656 = vst.msk [vmem:[#allocation2] sm:$0xff] %vm653, %v611
        %657 = vst.msk [vmem:[#allocation2 + $0x8] sm:$0xff] %vm653, %v612
        %v658 = vld [vmem:[#allocation4] sm:$0xff]
        %v659 = vld [vmem:[#allocation4 + $0x8] sm:$0xff]
        %v660 = vmax.f32 %v498, %v500
        %661 = vmax.xlane.f32.xlu0 %v660
        %v662 = vpop.xlane.xlu0 %661
        %v663 = vmax.f32 %v502, %v504
        %664 = vmax.xlane.f32.xlu0 %v663
        %v665 = vpop.xlane.xlu0 %664
        %v666 = vmax.f32 %v658, %v662
        %v667 = vmax.f32 %v659, %v665
        %v668 = vsub.f32 %v658, %v666
        %v669 = vsub.f32 %v659, %v667
        %v670 = vmul.f32 %v668, 1.442695
        %v671 = vpow.pop %v670
        %v672 = vmul.f32 %v669, 1.442695
        %v673 = vpow.pop %v672
        %675 = vset.pattern.permute.xlu0 0
        %676 = vperm.xlu0 %675, %v666
        %v677 = vpop.permute.xlu0 %676
        %680 = vset.pattern.permute.xlu0 0
        %681 = vperm.xlu0 %680, %v667
        %v682 = vpop.permute.xlu0 %681
        %v684 = vsub.f32 %v498, %v677
        %v685 = vsub.f32 %v500, %v677
        %v686 = vsub.f32 %v502, %v682
        %v687 = vsub.f32 %v504, %v682
        %v688 = vmul.f32 %v684, 1.442695
        %v689 = vpow.pop %v688
        %v690 = vmul.f32 %v685, 1.442695
        %v691 = vpow.pop %v690
        %v692 = vmul.f32 %v686, 1.442695
        %v693 = vpow.pop %v692
        %v694 = vmul.f32 %v687, 1.442695
        %v695 = vpow.pop %v694
        %v696 = vld [vmem:[#allocation5] sm:$0xff]
        %v697 = vld [vmem:[#allocation5 + $0x8] sm:$0xff]
        %v698 = vmul.f32 %v696, %v671
        %v699 = vmul.f32 %v697, %v673
        %v700 = vadd.f32 %v689, %v691
        %701 = vadd.xlane.f32.xlu0 %v700
        %v702 = vpop.xlane.xlu0 %701
        %v703 = vadd.f32 %v693, %v695
        %704 = vadd.xlane.f32.xlu0 %v703
        %v705 = vpop.xlane.xlu0 %704
        %v706 = vadd.f32 %v698, %v702
        %v707 = vadd.f32 %v699, %v705
        %708 = vst.msk [vmem:[#allocation5] sm:$0xff] %vm653, %v706
        %709 = vst.msk [vmem:[#allocation5 + $0x8] sm:$0xff] %vm653, %v707
        %v710 = vld [vmem:[#allocation6] sm:$0xff]
        %v711 = vld [vmem:[#allocation6 + $0x8] sm:$0xff]
        %v712 = vmul.f32 %v710, %v671
        %v713 = vmul.f32 %v711, %v673
        %v714 = vmul.f32 %v689, %v488
        %v715 = vmul.f32 %v691, %v490
        %v716 = vmul.f32 %v693, %v492
        %v717 = vmul.f32 %v695, %v494
        %v718 = vadd.f32 %v714, %v715
        %719 = vadd.xlane.f32.xlu0 %v718
        %v720 = vpop.xlane.xlu0 %719
        %v721 = vadd.f32 %v716, %v717
        %722 = vadd.xlane.f32.xlu0 %v721
        %v723 = vpop.xlane.xlu0 %722
        %v724 = vadd.f32 %v712, %v720
        %v725 = vadd.f32 %v713, %v723
        %726 = vst.msk [vmem:[#allocation6] sm:$0xff] %vm653, %v724
        %727 = vst.msk [vmem:[#allocation6 + $0x8] sm:$0xff] %vm653, %v725
        %728 = vst.msk [vmem:[#allocation4] sm:$0xff] %vm653, %v666
        %729 = vst.msk [vmem:[#allocation4 + $0x8] sm:$0xff] %vm653, %v667
        %v730 = vld [vmem:[#allocation7] sm:$0xff]
        %v731 = vld [vmem:[#allocation7 + $0x8] sm:$0xff]
        %v732 = vmax.f32 %v585, %v587
        %733 = vmax.xlane.f32.xlu0 %v732
        %v734 = vpop.xlane.xlu0 %733
        %v735 = vmax.f32 %v589, %v591
        %736 = vmax.xlane.f32.xlu0 %v735
        %v737 = vpop.xlane.xlu0 %736
        %v738 = vmax.f32 %v730, %v734
        %v739 = vmax.f32 %v731, %v737
        %v740 = vld [vmem:[#allocation8] sm:$0xff]
        %v741 = vld [vmem:[#allocation8 + $0x8] sm:$0xff]
        %v742 = vsub.f32 %v730, %v738
        %v743 = vsub.f32 %v731, %v739
        %v744 = vmul.f32 %v742, 1.442695
        %v745 = vpow.pop %v744
        %v746 = vmul.f32 %v743, 1.442695
        %v747 = vpow.pop %v746
        %v748 = vmul.f32 %v740, %v745
        %v749 = vmul.f32 %v741, %v747
        %751 = vset.pattern.permute.xlu0 0
        %752 = vperm.xlu0 %751, %v738
        %v753 = vpop.permute.xlu0 %752
        %756 = vset.pattern.permute.xlu0 0
        %757 = vperm.xlu0 %756, %v739
        %v758 = vpop.permute.xlu0 %757
        %v760 = vsub.f32 %v585, %v753
        %v761 = vsub.f32 %v587, %v753
        %v762 = vsub.f32 %v589, %v758
        %v763 = vsub.f32 %v591, %v758
        %v764 = vmul.f32 %v760, 1.442695
        %v765 = vpow.pop %v764
        %v766 = vmul.f32 %v761, 1.442695
        %v767 = vpow.pop %v766
        %v768 = vmul.f32 %v762, 1.442695
        %v769 = vpow.pop %v768
        %v770 = vmul.f32 %v763, 1.442695
        %v771 = vpow.pop %v770
        %v772 = vadd.f32 %v765, %v767
        %773 = vadd.xlane.f32.xlu0 %v772
        %v774 = vpop.xlane.xlu0 %773
        %v775 = vadd.f32 %v769, %v771
        %776 = vadd.xlane.f32.xlu0 %v775
        %v777 = vpop.xlane.xlu0 %776
        %v778 = vadd.f32 %v748, %v774
        %v779 = vadd.f32 %v749, %v777
        %780 = vst.msk [vmem:[#allocation8] sm:$0xff] %vm653, %v778
        %781 = vst.msk [vmem:[#allocation8 + $0x8] sm:$0xff] %vm653, %v779
        %782 = vst.msk [vmem:[#allocation7] sm:$0xff] %vm653, %v738
        %783 = vst.msk [vmem:[#allocation7 + $0x8] sm:$0xff] %vm653, %v739
        %v784 = vld [vmem:[#allocation9] sm:$0xff]
        %v785 = vld [vmem:[#allocation9 + $0x8] sm:$0xff]
        %v786 = vmax.f32 %v595, %v597
        %787 = vmax.xlane.f32.xlu0 %v786
        %v788 = vpop.xlane.xlu0 %787
        %v789 = vmax.f32 %v599, %v601
        %790 = vmax.xlane.f32.xlu0 %v789
        %v791 = vpop.xlane.xlu0 %790
        %v792 = vmax.f32 %v784, %v788
        %v793 = vmax.f32 %v785, %v791
        %v794 = vsub.f32 %v784, %v792
        %v795 = vsub.f32 %v785, %v793
        %v796 = vmul.f32 %v794, 1.442695
        %v797 = vpow.pop %v796
        %v798 = vmul.f32 %v795, 1.442695
        %v799 = vpow.pop %v798
        %801 = vset.pattern.permute.xlu0 0
        %802 = vperm.xlu0 %801, %v792
        %v803 = vpop.permute.xlu0 %802
        %806 = vset.pattern.permute.xlu0 0
        %807 = vperm.xlu0 %806, %v793
        %v808 = vpop.permute.xlu0 %807
        %v810 = vsub.f32 %v595, %v803
        %v811 = vsub.f32 %v597, %v803
        %v812 = vsub.f32 %v599, %v808
        %v813 = vsub.f32 %v601, %v808
        %v814 = vmul.f32 %v810, 1.442695
        %v815 = vpow.pop %v814
        %v816 = vmul.f32 %v811, 1.442695
        %v817 = vpow.pop %v816
        %v818 = vmul.f32 %v812, 1.442695
        %v819 = vpow.pop %v818
        %v820 = vmul.f32 %v813, 1.442695
        %v821 = vpow.pop %v820
        %v822 = vld [vmem:[#allocation10] sm:$0xff]
        %v823 = vld [vmem:[#allocation10 + $0x8] sm:$0xff]
        %v824 = vmul.f32 %v822, %v797
        %v825 = vmul.f32 %v823, %v799
        %v826 = vadd.f32 %v815, %v817
        %827 = vadd.xlane.f32.xlu0 %v826
        %v828 = vpop.xlane.xlu0 %827
        %v829 = vadd.f32 %v819, %v821
        %830 = vadd.xlane.f32.xlu0 %v829
        %v831 = vpop.xlane.xlu0 %830
        %v832 = vadd.f32 %v824, %v828
        %v833 = vadd.f32 %v825, %v831
        %834 = vst.msk [vmem:[#allocation10] sm:$0xff] %vm653, %v832
        %835 = vst.msk [vmem:[#allocation10 + $0x8] sm:$0xff] %vm653, %v833
        %v836 = vld [vmem:[#allocation11] sm:$0xff]
        %v837 = vld [vmem:[#allocation11 + $0x8] sm:$0xff]
        %v838 = vmul.f32 %v836, %v797
        %v839 = vmul.f32 %v837, %v799
        %v840 = vmul.f32 %v815, %v585
        %v841 = vmul.f32 %v817, %v587
        %v842 = vmul.f32 %v819, %v589
        %v843 = vmul.f32 %v821, %v591
        %v844 = vadd.f32 %v840, %v841
        %845 = vadd.xlane.f32.xlu0 %v844
        %v846 = vpop.xlane.xlu0 %845
        %v847 = vadd.f32 %v842, %v843
        %848 = vadd.xlane.f32.xlu0 %v847
        %v849 = vpop.xlane.xlu0 %848
        %v850 = vadd.f32 %v838, %v846
        %v851 = vadd.f32 %v839, %v849
        %852 = vst.msk [vmem:[#allocation11] sm:$0xff] %vm653, %v850
        %853 = vst.msk [vmem:[#allocation11 + $0x8] sm:$0xff] %vm653, %v851
        %854 = vst.msk [vmem:[#allocation9] sm:$0xff] %vm653, %v792
        %855 = vst.msk [vmem:[#allocation9 + $0x8] sm:$0xff] %vm653, %v793
        %p856 = scmp.eq.s32.totalorder %s22, 1
        // Predicated region
        $region117: #{albef_forward.3} parent=103 // pred_check
          %p857 = pneg %p856
        $region118: #{albef_forward.3} parent=103 // pred_check_branch
          %859 = sbr.rel (%p857) target = $region120
        $region119: #{albef_forward.3} parent=103 // pred_region
          %v860 = vlaneseq
          %v861 = vand.u32 %v860, 127
          %vm862 = vcmp.eq.s32.totalorder %v861, 0
          %v863 = vld [vmem:[#allocation2] sm:$0xff]
          %v864 = vld [vmem:[#allocation2 + $0x8] sm:$0xff]
          %866 = vset.pattern.permute.xlu0 0
          %867 = vperm.xlu0 %866, %v863
          %v868 = vpop.permute.xlu0 %867
          %871 = vset.pattern.permute.xlu0 0
          %872 = vperm.xlu0 %871, %v864
          %v873 = vpop.permute.xlu0 %872
          %v875 = vsel %vm862, %v868, 0.0
          %v876 = vsel %vm862, %v873, 0.0
          %vm877 = vcmp.eq.s32.totalorder %v861, 1
          %v878 = vld [vmem:[#allocation3] sm:$0xff]
          %v879 = vld [vmem:[#allocation3 + $0x8] sm:$0xff]
          %881 = vset.pattern.permute.xlu0 0
          %882 = vperm.xlu0 %881, %v878
          %v883 = vpop.permute.xlu0 %882
          %886 = vset.pattern.permute.xlu0 0
          %887 = vperm.xlu0 %886, %v879
          %v888 = vpop.permute.xlu0 %887
          %v890 = vsel %vm877, %v883, 0.0
          %v891 = vsel %vm877, %v888, 0.0
          %v892 = vadd.f32 %v875, %v890
          %v893 = vadd.f32 %v876, %v891
          %vm894 = vcmp.eq.s32.totalorder %v861, 2
          %v895 = vld [vmem:[#allocation4] sm:$0xff]
          %v896 = vld [vmem:[#allocation4 + $0x8] sm:$0xff]
          %898 = vset.pattern.permute.xlu0 0
          %899 = vperm.xlu0 %898, %v895
          %v900 = vpop.permute.xlu0 %899
          %903 = vset.pattern.permute.xlu0 0
          %904 = vperm.xlu0 %903, %v896
          %v905 = vpop.permute.xlu0 %904
          %v907 = vsel %vm894, %v900, 0.0
          %v908 = vsel %vm894, %v905, 0.0
          %v909 = vadd.f32 %v892, %v907
          %v910 = vadd.f32 %v893, %v908
          %vm911 = vcmp.eq.s32.totalorder %v861, 3
          %v912 = vld [vmem:[#allocation5] sm:$0xff]
          %v913 = vld [vmem:[#allocation5 + $0x8] sm:$0xff]
          %915 = vset.pattern.permute.xlu0 0
          %916 = vperm.xlu0 %915, %v912
          %v917 = vpop.permute.xlu0 %916
          %920 = vset.pattern.permute.xlu0 0
          %921 = vperm.xlu0 %920, %v913
          %v922 = vpop.permute.xlu0 %921
          %v924 = vsel %vm911, %v917, 0.0
          %v925 = vsel %vm911, %v922, 0.0
          %v926 = vadd.f32 %v909, %v924
          %v927 = vadd.f32 %v910, %v925
          %vm928 = vcmp.eq.s32.totalorder %v861, 4
          %v929 = vld [vmem:[#allocation6] sm:$0xff]
          %v930 = vld [vmem:[#allocation6 + $0x8] sm:$0xff]
          %932 = vset.pattern.permute.xlu0 0
          %933 = vperm.xlu0 %932, %v929
          %v934 = vpop.permute.xlu0 %933
          %937 = vset.pattern.permute.xlu0 0
          %938 = vperm.xlu0 %937, %v930
          %v939 = vpop.permute.xlu0 %938
          %v941 = vsel %vm928, %v934, 0.0
          %v942 = vsel %vm928, %v939, 0.0
          %v943 = vadd.f32 %v926, %v941
          %v944 = vadd.f32 %v927, %v942
          %945 = vst [vmem:[%s376] sm:$0xff] %v943
          %946 = vst [vmem:[%s376 + $0x8] sm:$0xff] %v944
          %v947 = vld [vmem:[#allocation7] sm:$0xff]
          %v948 = vld [vmem:[#allocation7 + $0x8] sm:$0xff]
          %950 = vset.pattern.permute.xlu0 0
          %951 = vperm.xlu0 %950, %v947
          %v952 = vpop.permute.xlu0 %951
          %955 = vset.pattern.permute.xlu0 0
          %956 = vperm.xlu0 %955, %v948
          %v957 = vpop.permute.xlu0 %956
          %v959 = vsel %vm862, %v952, 0.0
          %v960 = vsel %vm862, %v957, 0.0
          %v961 = vld [vmem:[#allocation8] sm:$0xff]
          %v962 = vld [vmem:[#allocation8 + $0x8] sm:$0xff]
          %964 = vset.pattern.permute.xlu0 0
          %965 = vperm.xlu0 %964, %v961
          %v966 = vpop.permute.xlu0 %965
          %969 = vset.pattern.permute.xlu0 0
          %970 = vperm.xlu0 %969, %v962
          %v971 = vpop.permute.xlu0 %970
          %v973 = vsel %vm877, %v966, 0.0
          %v974 = vsel %vm877, %v971, 0.0
          %v975 = vadd.f32 %v959, %v973
          %v976 = vadd.f32 %v960, %v974
          %v977 = vld [vmem:[#allocation9] sm:$0xff]
          %v978 = vld [vmem:[#allocation9 + $0x8] sm:$0xff]
          %980 = vset.pattern.permute.xlu0 0
          %981 = vperm.xlu0 %980, %v977
          %v982 = vpop.permute.xlu0 %981
          %985 = vset.pattern.permute.xlu0 0
          %986 = vperm.xlu0 %985, %v978
          %v987 = vpop.permute.xlu0 %986
          %v989 = vsel %vm894, %v982, 0.0
          %v990 = vsel %vm894, %v987, 0.0
          %v991 = vadd.f32 %v975, %v989
          %v992 = vadd.f32 %v976, %v990
          %v993 = vld [vmem:[#allocation10] sm:$0xff]
          %v994 = vld [vmem:[#allocation10 + $0x8] sm:$0xff]
          %996 = vset.pattern.permute.xlu0 0
          %997 = vperm.xlu0 %996, %v993
          %v998 = vpop.permute.xlu0 %997
          %1001 = vset.pattern.permute.xlu0 0
          %1002 = vperm.xlu0 %1001, %v994
          %v1003 = vpop.permute.xlu0 %1002
          %v1005 = vsel %vm911, %v998, 0.0
          %v1006 = vsel %vm911, %v1003, 0.0
          %v1007 = vadd.f32 %v991, %v1005
          %v1008 = vadd.f32 %v992, %v1006
          %v1009 = vld [vmem:[#allocation11] sm:$0xff]
          %v1010 = vld [vmem:[#allocation11 + $0x8] sm:$0xff]
          %1012 = vset.pattern.permute.xlu0 0
          %1013 = vperm.xlu0 %1012, %v1009
          %v1014 = vpop.permute.xlu0 %1013
          %1017 = vset.pattern.permute.xlu0 0
          %1018 = vperm.xlu0 %1017, %v1010
          %v1019 = vpop.permute.xlu0 %1018
          %v1021 = vsel %vm928, %v1014, 0.0
          %v1022 = vsel %vm928, %v1019, 0.0
          %v1023 = vadd.f32 %v1007, %v1021
          %v1024 = vadd.f32 %v1008, %v1022
          %1025 = vst [vmem:[%s381] sm:$0xff] %v1023
          %1026 = vst [vmem:[%s381 + $0x8] sm:$0xff] %v1024
        $region120: #{albef_forward.3} parent=103 // pred_fallthru
          _
        %p1027 = scmp.lt.s32.totalorder %s21, 1
        %s1028 = scalar_select %p1027, %s21, 1
        %s1029 = smul.addr %s1028, 2
        %s1030 = smul.addr %s1029, 8
        %s1031 = scalar_lea.vmem %s4, %s1030
        %p1032 = scmp.lt.s32.totalorder %s21, 1
        %s1033 = scalar_select %p1032, %s21, 1
        %s1034 = smul.addr %s1033, 2
        %s1035 = smul.addr %s1034, 8
        %s1036 = scalar_lea.vmem %s5, %s1035
        // Predicated region
        $region121: #{albef_forward.3} parent=103 // pred_check
          %p1037 = pneg %p149
        $region122: #{albef_forward.3} parent=103 // pred_check_branch
          %1039 = sbr.rel (%p1037) target = $region124
        $region123: #{albef_forward.3} parent=103 // pred_region
          _
        $region124: #{albef_forward.3} parent=103 // pred_fallthru
          _
        // Predicated region
        $region125: #{albef_forward.3} parent=103 // pred_check
          %p1040 = pneg %p175
        $region126: #{albef_forward.3} parent=103 // pred_check_branch
          %1042 = sbr.rel (%p1040) target = $region128
        $region127: #{albef_forward.3} parent=103 // pred_region
          _
        $region128: #{albef_forward.3} parent=103 // pred_fallthru
          _
      $region104: #{albef_forward.3} parent=5 // pred_fallthru
        _
      %p1043 = scmp.le.s32.totalorder 2, %s12
      // Predicated region
      $region129: #{albef_forward.3} parent=5 // pred_check
        %p1044 = pneg %p1043
      $region130: #{albef_forward.3} parent=5 // pred_check_branch
        %1046 = sbr.rel (%p1044) target = $region132
      $region131: #{albef_forward.3} parent=5 // pred_region
        %s1047 = ssub.s32 %s12, 2
        // Predicated region
        $region133: #{albef_forward.3} parent=131 // pred_check
          %p1048 = pneg %p155
        $region134: #{albef_forward.3} parent=131 // pred_check_branch
          %1050 = sbr.rel (%p1048) target = $region136
        $region135: #{albef_forward.3} parent=131 // pred_region
          %p1051 = scmp.lt.s32.totalorder %s23, 1
          %s1052 = scalar_select %p1051, %s23, 1
          %s1053 = smul.addr %s1052, 2
          %s1054 = smul.addr %s1053, 8
          %s1055 = scalar_lea.vmem %s4, %s1054
        $region136: #{albef_forward.3} parent=131 // pred_fallthru
          _
        // Predicated region
        $region137: #{albef_forward.3} parent=131 // pred_check
          %p1056 = pneg %p181
        $region138: #{albef_forward.3} parent=131 // pred_check_branch
          %1058 = sbr.rel (%p1056) target = $region140
        $region139: #{albef_forward.3} parent=131 // pred_region
          %p1059 = scmp.lt.s32.totalorder %s23, 1
          %s1060 = scalar_select %p1059, %s23, 1
          %s1061 = smul.addr %s1060, 2
          %s1062 = smul.addr %s1061, 8
          %s1063 = scalar_lea.vmem %s5, %s1062
        $region140: #{albef_forward.3} parent=131 // pred_fallthru
          _
      $region132: #{albef_forward.3} parent=5 // pred_fallthru
        _
    $region6: #{albef_forward.3} parent=1 // loop_footer
      %s16 = sadd.s32 1, %s12
    $region7: #{albef_forward.3} parent=1 // loop_footer_branch
      %11 = sbr.rel target = $region3
    $region8: #{albef_forward.3} parent=1 // loop_exit
      _

</llo_original>
